<compile_context>
chip_gen: v5e
topology: v5e:2x2
jax: 0.10.0
libtpu: 0.0.40
codegen_flags: <defaults>
</compile_context>

<pallas_src>
import functools

import jax
import jax.numpy as jnp
from jax.experimental import pallas as pl
from jax.experimental.pallas import tpu as pltpu


_C1 = 128       # conv1 channels padded 64 -> 128 (lane-dense, full MXU contraction for conv2)
_C2 = 256       # conv2 / fc1 / fc2 width
_F3 = 128       # fc3 outputs padded 64 -> 128
_OUT_PAD = 128  # fc4 columns padded to one full lane group -> unmasked stores


# ----------------------------- fused Pallas kernel -----------------------------

def _fused_kernel(x_ref,
                  w1_ref, b1_ref,
                  w2_ref, b2_ref,
                  wf1_ref, bf1_ref,
                  wf2_ref, bf2_ref,
                  wf3_ref, bf3_ref,
                  wf4_ref, bf4_ref,
                  out_ref, acc_ref):
    """Whole forward pass for one batch tile.

    x_ref   : (1, steps*tile_n, features)  row l*tile_n + n = (position l, batch row n)
    wf1_ref : (steps, 256, 256)            fc1 weight regrouped per position (BN folded)
    out_ref : (tile_n, 128)                lane-padded final output (f32)
    acc_ref : (tile_n, 256) f32 VMEM scratch accumulator for fc1.
    All BatchNorm scale/shift has been folded into the weights/biases offline; all
    weights arrive in bf16, biases in f32.
    """
    steps = wf1_ref.shape[0]
    tile_n = acc_ref.shape[0]

    # conv1/conv2 (k=1) + folded BN + ReLU, merged across all `steps` positions:
    # one (steps*tile_n, F) @ (F, 128) and one (steps*tile_n, 128) @ (128, 256).
    x_all = x_ref[0].astype(jnp.bfloat16)
    h = jnp.dot(x_all, w1_ref[...], preferred_element_type=jnp.float32)
    h = jnp.maximum(h + b1_ref[...], 0.0)
    h = jnp.dot(h.astype(jnp.bfloat16), w2_ref[...], preferred_element_type=jnp.float32)
    h = jnp.maximum(h + b2_ref[...], 0.0)
    h = h.astype(jnp.bfloat16)                                   # (steps*tile_n, 256)

    # fc1: the torch Flatten (index c*steps + l) was handled offline by regrouping the
    # fc1 weight per position, so fc1 becomes a K-chunked accumulation over the steps.
    # Accumulate in-place into VMEM scratch to bound the live range.
    acc_ref[...] = jnp.dot(h[0:tile_n], wf1_ref[0],
                           preferred_element_type=jnp.float32)
    for l in range(1, steps):                                    # static unrolled, steps small
        acc_ref[...] += jnp.dot(h[l * tile_n:(l + 1) * tile_n], wf1_ref[l],
                                preferred_element_type=jnp.float32)

    # fc1 bias (bn3 folded) + relu      (dropout1 is identity in eval mode)
    a = jnp.maximum(acc_ref[...] + bf1_ref[...], 0.0)
    # fc2 + bn4 + relu                  (dropout2 is identity in eval mode)
    a = jnp.dot(a.astype(jnp.bfloat16), wf2_ref[...], preferred_element_type=jnp.float32)
    a = jnp.maximum(a + bf2_ref[...], 0.0)
    # fc3 + bn5 + relu (output padded to 128 lanes, padded lanes stay exactly 0)
    a = jnp.dot(a.astype(jnp.bfloat16), wf3_ref[...], preferred_element_type=jnp.float32)
    a = jnp.maximum(a + bf3_ref[...], 0.0)
    # fc4 (no activation), lane-padded to 128 columns
    out_ref[...] = (jnp.dot(a.astype(jnp.bfloat16), wf4_ref[...],
                            preferred_element_type=jnp.float32) + bf4_ref[...])


# ----------------------------- parameter preparation ---------------------------

def _round_up(x, m):
    return (x + m - 1) // m * m


def make_params(key, steps, features, outputs):
    """Deterministic synthetic parameters matching CNNModelBN.__init__ shapes.

    Weights stored as (fan_in, fan_out); biases as (1, fan_out).
    Each BN layer is a (gamma, beta, running_mean, running_var) tuple.
    """
    ks = jax.random.split(key, 11)

    def lin(k, fan_in, fan_out):
        kw, kb = jax.random.split(k)
        bound = 1.0 / (fan_in ** 0.5)
        w = jax.random.uniform(kw, (fan_in, fan_out), jnp.float32, -bound, bound)
        b = jax.random.uniform(kb, (1, fan_out), jnp.float32, -bound, bound)
        return w, b

    def bn(k, c):
        k1, k2, k3, k4 = jax.random.split(k, 4)
        gamma = jax.random.uniform(k1, (1, c), jnp.float32, 0.5, 1.5)
        beta = 0.1 * jax.random.normal(k2, (1, c), jnp.float32)
        rmean = 0.1 * jax.random.normal(k3, (1, c), jnp.float32)
        rvar = jax.random.uniform(k4, (1, c), jnp.float32, 0.5, 1.5)
        return gamma, beta, rmean, rvar

    p = {}
    p["w_c1"], p["b_c1"] = lin(ks[0], features, 64)
    p["w_c2"], p["b_c2"] = lin(ks[1], 64, 256)
    p["w_f1"], p["b_f1"] = lin(ks[2], 256 * steps, 256)
    p["w_f2"], p["b_f2"] = lin(ks[3], 256, 256)
    p["w_f3"], p["b_f3"] = lin(ks[4], 256, 64)
    p["w_f4"], p["b_f4"] = lin(ks[5], 64, outputs)
    p["bn1"] = bn(ks[6], 64)
    p["bn2"] = bn(ks[7], 256)
    p["bn3"] = bn(ks[8], 256)
    p["bn4"] = bn(ks[9], 256)
    p["bn5"] = bn(ks[10], 64)
    return p


def fold_params(params, *, steps, outputs, eps=1e-5):
    """Offline constant prep: fold inference BN into weights/biases, regroup fc1 per
    time position, zero-pad 64-wide dims to 128, lane-pad fc4, cast weights to bf16."""
    def fold(w, b, bn):
        gamma, beta, mean, var = bn
        scale = gamma / jnp.sqrt(var + eps)          # (1, C_out)
        shift = beta - mean * scale
        return w * scale, b * scale + shift

    w1, b1 = fold(params["w_c1"], params["b_c1"], params["bn1"])     # (F,64), (1,64)
    w2, b2 = fold(params["w_c2"], params["b_c2"], params["bn2"])     # (64,256)
    wf1, bf1 = fold(params["w_f1"], params["b_f1"], params["bn3"])   # (256*steps,256)
    wf2, bf2 = fold(params["w_f2"], params["b_f2"], params["bn4"])   # (256,256)
    wf3, bf3 = fold(params["w_f3"], params["b_f3"], params["bn5"])   # (256,64)
    wf4, bf4 = params["w_f4"], params["b_f4"]                        # (64,out)

    # Pad 64-wide dims to 128. Padded columns have zero weight & zero bias, so they stay
    # exactly zero through ReLU, and the matching padded contraction rows are zero too.
    w1 = jnp.pad(w1, ((0, 0), (0, _C1 - 64)))
    b1 = jnp.pad(b1, ((0, 0), (0, _C1 - 64)))
    w2 = jnp.pad(w2, ((0, _C1 - 64), (0, 0)))
    wf3 = jnp.pad(wf3, ((0, 0), (0, _F3 - 64)))
    bf3 = jnp.pad(bf3, ((0, 0), (0, _F3 - 64)))
    wf4 = jnp.pad(wf4, ((0, _F3 - 64), (0, _OUT_PAD - outputs)))
    bf4 = jnp.pad(bf4, ((0, 0), (0, _OUT_PAD - outputs)))

    # torch.Flatten on (N, 256, steps) uses row index c*steps + l -> regroup per l.
    wf1 = jnp.transpose(wf1.reshape(256, steps, 256), (1, 0, 2))     # (steps, 256, 256)

    bfc = lambda w: w.astype(jnp.bfloat16)
    return {
        "w1": bfc(w1), "b1": b1, "w2": bfc(w2), "b2": b2,
        "wf1": bfc(wf1), "bf1": bf1, "wf2": bfc(wf2), "bf2": bf2,
        "wf3": bfc(wf3), "bf3": bf3, "wf4": bfc(wf4), "bf4": bf4,
    }


# ----------------------------- forward wrapper ---------------------------------

@functools.partial(jax.jit, static_argnames=("steps", "features", "outputs", "tile_n"))
def cnn_model_bn_forward(x, folded, *, steps, features, outputs, tile_n=512):
    """x: (N, features, steps) -> (N, outputs). Inference-mode forward."""
    N = x.shape[0]
    # Batch tile: big enough to amortize per-grid-step overhead, but aim for >=2 tiles
    # when the batch allows so the "parallel" axis can shard across v7x's 2 TensorCores.
    tile = max(8, min(tile_n, _round_up(-(-N // 2), 8)))
    n_pad = _round_up(N, tile)
    n_tiles = n_pad // tile

    # Reorder the (tiny) input once in XLA so each batch tile arrives as a single
    # (steps*tile, F) slab with row index l*tile + n (no in-kernel transpose/reshape).
    x_r = jnp.transpose(x.astype(jnp.float32), (2, 0, 1))             # (L, N, F)
    x_r = jnp.pad(x_r, ((0, 0), (0, n_pad - N), (0, 0)))              # (L, n_pad, F)
    x_r = jnp.transpose(x_r.reshape(steps, n_tiles, tile, features),
                        (1, 0, 2, 3)).reshape(n_tiles, steps * tile, features)

    grid = (n_tiles,)
    c2 = lambda i: (0, 0)
    c3 = lambda i: (0, 0, 0)
    # Weight/bias index_maps are constant across the grid -> DMA'd once, stay resident.
    in_specs = [
        pl.BlockSpec((1, steps * tile, features), lambda i: (i, 0, 0)),  # x slab
        pl.BlockSpec((features, _C1), c2),   # conv1 weight (BN1 folded, padded, bf16)
        pl.BlockSpec((1, _C1), c2),          # conv1 bias (f32)
        pl.BlockSpec((_C1, _C2), c2),        # conv2 weight (BN2 folded, padded K, bf16)
        pl.BlockSpec((1, _C2), c2),          # conv2 bias
        pl.BlockSpec((steps, _C2, _C2), c3), # fc1 weight per position (BN3 folded, bf16)
        pl.BlockSpec((1, _C2), c2),          # fc1 bias
        pl.BlockSpec((_C2, _C2), c2),        # fc2 weight (BN4 folded, bf16)
        pl.BlockSpec((1, _C2), c2),          # fc2 bias
        pl.BlockSpec((_C2, _F3), c2),        # fc3 weight (BN5 folded, padded, bf16)
        pl.BlockSpec((1, _F3), c2),          # fc3 bias
        pl.BlockSpec((_F3, _OUT_PAD), c2),   # fc4 weight (padded, bf16)
        pl.BlockSpec((1, _OUT_PAD), c2),     # fc4 bias
    ]
    out_spec = pl.BlockSpec((tile, _OUT_PAD), lambda i: (i, 0))

    # Advisory cost estimate so XLA can schedule around the custom call.
    flops = (2 * n_pad * steps * (features * _C1 + _C1 * _C2 + _C2 * _C2)
             + 2 * n_pad * (_C2 * _C2 + _C2 * _F3 + _F3 * _OUT_PAD))
    w_bytes = sum(int(v.size) * v.dtype.itemsize
                  for v in jax.tree_util.tree_leaves(folded))
    bytes_accessed = int(x_r.size) * 4 + w_bytes + n_pad * _OUT_PAD * 4
    cost = pl.CostEstimate(flops=flops, transcendentals=0, bytes_accessed=bytes_accessed)

    out = pl.pallas_call(
        _fused_kernel,
        out_shape=jax.ShapeDtypeStruct((n_pad, _OUT_PAD), jnp.float32),
        grid=grid,
        in_specs=in_specs,
        out_specs=out_spec,
        scratch_shapes=[pltpu.VMEM((tile, _C2), jnp.float32)],   # fc1 accumulator
        compiler_params=pltpu.CompilerParams(
            dimension_semantics=("parallel",),
            vmem_limit_bytes=48 * 1024 * 1024,
        ),
        cost_estimate=cost,
    )(x_r,
      folded["w1"], folded["b1"], folded["w2"], folded["b2"],
      folded["wf1"], folded["bf1"], folded["wf2"], folded["bf2"],
      folded["wf3"], folded["bf3"], folded["wf4"], folded["bf4"])

    return out[:N, :outputs]


# ----------------------------- references (plain JAX) ---------------------------

def ref_forward(x, p, *, steps, features, eps=1e-5):
    """Exact f32 reference with unfolded BatchNorm (matches the torch module math)."""
    def bn_apply(h, bn):
        gamma, beta, mean, var = bn
        return (h - mean) / jnp.sqrt(var + eps) * gamma + beta

    N = x.shape[0]
    h = jnp.transpose(x, (0, 2, 1)).reshape(N * steps, features)
    h = jnp.maximum(bn_apply(h @ p["w_c1"] + p["b_c1"], p["bn1"]), 0.0)
    h = jnp.maximum(bn_apply(h @ p["w_c2"] + p["b_c2"], p["bn2"]), 0.0)
    # torch.Flatten on (N, 256, steps): index c*steps + l
    h = jnp.transpose(h.reshape(N, steps, 256), (0, 2, 1)).reshape(N, 256 * steps)
    h = jnp.maximum(bn_apply(h @ p["w_f1"] + p["b_f1"], p["bn3"]), 0.0)
    h = jnp.maximum(bn_apply(h @ p["w_f2"] + p["b_f2"], p["bn4"]), 0.0)
    h = jnp.maximum(bn_apply(h @ p["w_f3"] + p["b_f3"], p["bn5"]), 0.0)
    return h @ p["w_f4"] + p["b_f4"]


def ref_forward_folded(x, f, *, steps, outputs):
    """Plain-JAX forward using the SAME bf16 folded/padded weights as the kernel
    (isolates kernel bugs from bf16 quantization of the weights)."""
    N = x.shape[0]
    bf = jnp.bfloat16
    h = jnp.transpose(x.astype(jnp.float32), (2, 0, 1)).reshape(steps * N, -1)
    h = jnp.maximum(jnp.dot(h.astype(bf), f["w1"],
                            preferred_element_type=jnp.float32) + f["b1"], 0.0)
    h = jnp.maximum(jnp.dot(h.astype(bf), f["w2"],
                            preferred_element_type=jnp.float32) + f["b2"], 0.0)
    h = h.astype(bf).reshape(steps, N, _C2)
    acc = jnp.zeros((N, _C2), jnp.float32)
    for l in range(steps):
        acc = acc + jnp.dot(h[l], f["wf1"][l], preferred_element_type=jnp.float32)
    a = jnp.maximum(acc + f["bf1"], 0.0)
    a = jnp.maximum(jnp.dot(a.astype(bf), f["wf2"],
                            preferred_element_type=jnp.float32) + f["bf2"], 0.0)
    a = jnp.maximum(jnp.dot(a.astype(bf), f["wf3"],
                            preferred_element_type=jnp.float32) + f["bf3"], 0.0)
    out = jnp.dot(a.astype(bf), f["wf4"], preferred_element_type=jnp.float32) + f["bf4"]
    return out[:, :outputs]


# ------------------------------------ main --------------------------------------

if __name__ == "__main__":
    steps, features, outputs = 8, 4, 3
    batch = 2

    key = jax.random.PRNGKey(0)
    k_x, k_p = jax.random.split(key)

    x = jax.random.normal(k_x, (batch, features, steps), jnp.float32)
    params = make_params(k_p, steps, features, outputs)
    folded = fold_params(params, steps=steps, outputs=outputs)

    y = cnn_model_bn_forward(x, folded, steps=steps, features=features, outputs=outputs)
    y = jax.block_until_ready(y)
    assert y.shape == (batch, outputs), y.shape

    # Loose check vs the exact f32 reference (kernel runs bf16-operand MXU matmuls
    # with f32 accumulation, so a few-percent deviation is expected).
    y_ref = ref_forward(x, params, steps=steps, features=features)
    max_err = float(jnp.max(jnp.abs(y - y_ref)))
    assert jnp.allclose(y, y_ref, atol=1e-1, rtol=1e-1), max_err

    # Tight check vs a plain-JAX model using the identical bf16 folded weights.
    y_folded = ref_forward_folded(x, folded, steps=steps, outputs=outputs)
    max_err_folded = float(jnp.max(jnp.abs(y - y_folded)))
    assert jnp.allclose(y, y_folded, atol=2e-3, rtol=2e-3), max_err_folded

    print("KERNEL_OK")
</pallas_src>

<mosaic_0001>
module attributes {stable_mosaic.version = 11 : i64} {
  func.func @_fused_kernel(%arg0: i32, %arg1: memref<1x64x4xf32, #tpu.memory_space<vmem>>, %arg2: memref<4x128xbf16, #tpu.memory_space<vmem>>, %arg3: memref<1x128xf32, #tpu.memory_space<vmem>>, %arg4: memref<128x256xbf16, #tpu.memory_space<vmem>>, %arg5: memref<1x256xf32, #tpu.memory_space<vmem>>, %arg6: memref<8x256x256xbf16, #tpu.memory_space<vmem>>, %arg7: memref<1x256xf32, #tpu.memory_space<vmem>>, %arg8: memref<256x256xbf16, #tpu.memory_space<vmem>>, %arg9: memref<1x256xf32, #tpu.memory_space<vmem>>, %arg10: memref<256x128xbf16, #tpu.memory_space<vmem>>, %arg11: memref<1x128xf32, #tpu.memory_space<vmem>>, %arg12: memref<128x128xbf16, #tpu.memory_space<vmem>>, %arg13: memref<1x128xf32, #tpu.memory_space<vmem>>, %arg14: memref<8x128xf32, #tpu.memory_space<vmem>>, %arg15: memref<8x256xf32, #tpu.memory_space<vmem>>) attributes {dimension_semantics = [#tpu.dimension_semantics<parallel>], iteration_bounds = array<i64: 1>, scalar_prefetch = 0 : i64, scratch_operands = 1 : i64, tpu.core_type = #tpu.core_type<tc>, window_params = [{transform_indices = @transform_0, window_bounds = array<i64: 1, 64, 4>}, {pipeline_mode = #tpu.pipeline_mode<synchronous>, transform_indices = @transform_1, window_bounds = array<i64: 4, 128>}, {pipeline_mode = #tpu.pipeline_mode<synchronous>, transform_indices = @transform_2, window_bounds = array<i64: 1, 128>}, {pipeline_mode = #tpu.pipeline_mode<synchronous>, transform_indices = @transform_3, window_bounds = array<i64: 128, 256>}, {pipeline_mode = #tpu.pipeline_mode<synchronous>, transform_indices = @transform_4, window_bounds = array<i64: 1, 256>}, {pipeline_mode = #tpu.pipeline_mode<synchronous>, transform_indices = @transform_5, window_bounds = array<i64: 8, 256, 256>}, {pipeline_mode = #tpu.pipeline_mode<synchronous>, transform_indices = @transform_6, window_bounds = array<i64: 1, 256>}, {pipeline_mode = #tpu.pipeline_mode<synchronous>, transform_indices = @transform_7, window_bounds = array<i64: 256, 256>}, {pipeline_mode = #tpu.pipeline_mode<synchronous>, transform_indices = @transform_8, window_bounds = array<i64: 1, 256>}, {pipeline_mode = #tpu.pipeline_mode<synchronous>, transform_indices = @transform_9, window_bounds = array<i64: 256, 128>}, {pipeline_mode = #tpu.pipeline_mode<synchronous>, transform_indices = @transform_10, window_bounds = array<i64: 1, 128>}, {pipeline_mode = #tpu.pipeline_mode<synchronous>, transform_indices = @transform_11, window_bounds = array<i64: 128, 128>}, {pipeline_mode = #tpu.pipeline_mode<synchronous>, transform_indices = @transform_12, window_bounds = array<i64: 1, 128>}, {transform_indices = @transform_13, window_bounds = array<i64: 8, 128>}]} {
    %c0 = arith.constant 0 : index
    %c0_0 = arith.constant 0 : index
    %c0_1 = arith.constant 0 : index
    %0 = vector.load %arg1[%c0, %c0_0, %c0_1] : memref<1x64x4xf32, #tpu.memory_space<vmem>>, vector<1x64x4xf32>
    %1 = vector.shape_cast %0 : vector<1x64x4xf32> to vector<64x4xf32>
    %2 = arith.truncf %1 : vector<64x4xf32> to vector<64x4xbf16>
    %c0_2 = arith.constant 0 : index
    %c0_3 = arith.constant 0 : index
    %3 = vector.load %arg2[%c0_2, %c0_3] : memref<4x128xbf16, #tpu.memory_space<vmem>>, vector<4x128xbf16>
    %cst = arith.constant dense<0.000000e+00> : vector<64x128xf32>
    %4 = tpu.matmul %2, %3, %cst {dimension_numbers = #tpu.dot_dimension_numbers<[1], [0], [0], [1], [0, 0, 1, 1], [], []>} : vector<64x4xbf16>, vector<4x128xbf16>, vector<64x128xf32> -> vector<64x128xf32>
    %c0_4 = arith.constant 0 : index
    %c0_5 = arith.constant 0 : index
    %5 = vector.load %arg3[%c0_4, %c0_5] : memref<1x128xf32, #tpu.memory_space<vmem>>, vector<1x128xf32>
    %6 = vector.broadcast %5 : vector<1x128xf32> to vector<64x128xf32>
    %7 = arith.addf %4, %6 : vector<64x128xf32>
    %cst_6 = arith.constant 0.000000e+00 : f32
    %8 = vector.broadcast %cst_6 : f32 to vector<64x128xf32>
    %9 = arith.maximumf %7, %8 : vector<64x128xf32>
    %10 = arith.truncf %9 : vector<64x128xf32> to vector<64x128xbf16>
    %c0_7 = arith.constant 0 : index
    %c0_8 = arith.constant 0 : index
    %11 = vector.load %arg4[%c0_7, %c0_8] : memref<128x256xbf16, #tpu.memory_space<vmem>>, vector<128x256xbf16>
    %cst_9 = arith.constant dense<0.000000e+00> : vector<64x256xf32>
    %12 = tpu.matmul %10, %11, %cst_9 {dimension_numbers = #tpu.dot_dimension_numbers<[1], [0], [0], [1], [0, 0, 1, 1], [], []>} : vector<64x128xbf16>, vector<128x256xbf16>, vector<64x256xf32> -> vector<64x256xf32>
    %c0_10 = arith.constant 0 : index
    %c0_11 = arith.constant 0 : index
    %13 = vector.load %arg5[%c0_10, %c0_11] : memref<1x256xf32, #tpu.memory_space<vmem>>, vector<1x256xf32>
    %14 = vector.broadcast %13 : vector<1x256xf32> to vector<64x256xf32>
    %15 = arith.addf %12, %14 : vector<64x256xf32>
    %cst_12 = arith.constant 0.000000e+00 : f32
    %16 = vector.broadcast %cst_12 : f32 to vector<64x256xf32>
    %17 = arith.maximumf %15, %16 : vector<64x256xf32>
    %18 = arith.truncf %17 : vector<64x256xf32> to vector<64x256xbf16>
    %19 = vector.extract_strided_slice %18 {offsets = [0, 0], sizes = [8, 256], strides = [1, 1]} : vector<64x256xbf16> to vector<8x256xbf16>
    %c0_13 = arith.constant 0 : index
    %c0_14 = arith.constant 0 : index
    %c0_15 = arith.constant 0 : index
    %20 = vector.load %arg6[%c0_13, %c0_14, %c0_15] : memref<8x256x256xbf16, #tpu.memory_space<vmem>>, vector<1x256x256xbf16>
    %21 = vector.shape_cast %20 : vector<1x256x256xbf16> to vector<256x256xbf16>
    %cst_16 = arith.constant dense<0.000000e+00> : vector<8x256xf32>
    %22 = tpu.matmul %19, %21, %cst_16 {dimension_numbers = #tpu.dot_dimension_numbers<[1], [0], [0], [1], [0, 0, 1, 1], [], []>} : vector<8x256xbf16>, vector<256x256xbf16>, vector<8x256xf32> -> vector<8x256xf32>
    %c0_17 = arith.constant 0 : index
    %c0_18 = arith.constant 0 : index
    %23 = vector.load %arg15[%c0_17, %c0_18] : memref<8x256xf32, #tpu.memory_space<vmem>>, vector<8x256xf32>
    tpu.vector_store %arg15[%c0_17, %c0_18], %22 {strides = array<i32>} : memref<8x256xf32, #tpu.memory_space<vmem>>, vector<8x256xf32>,
    %c0_19 = arith.constant 0 : index
    %c0_20 = arith.constant 0 : index
    %24 = vector.load %arg15[%c0_19, %c0_20] : memref<8x256xf32, #tpu.memory_space<vmem>>, vector<8x256xf32>
    %25 = vector.extract_strided_slice %18 {offsets = [8, 0], sizes = [8, 256], strides = [1, 1]} : vector<64x256xbf16> to vector<8x256xbf16>
    %c1 = arith.constant 1 : index
    %c0_21 = arith.constant 0 : index
    %c0_22 = arith.constant 0 : index
    %26 = vector.load %arg6[%c1, %c0_21, %c0_22] : memref<8x256x256xbf16, #tpu.memory_space<vmem>>, vector<1x256x256xbf16>
    %27 = vector.shape_cast %26 : vector<1x256x256xbf16> to vector<256x256xbf16>
    %cst_23 = arith.constant dense<0.000000e+00> : vector<8x256xf32>
    %28 = tpu.matmul %25, %27, %cst_23 {dimension_numbers = #tpu.dot_dimension_numbers<[1], [0], [0], [1], [0, 0, 1, 1], [], []>} : vector<8x256xbf16>, vector<256x256xbf16>, vector<8x256xf32> -> vector<8x256xf32>
    %29 = arith.addf %24, %28 : vector<8x256xf32>
    %c0_24 = arith.constant 0 : index
    %c0_25 = arith.constant 0 : index
    %30 = vector.load %arg15[%c0_24, %c0_25] : memref<8x256xf32, #tpu.memory_space<vmem>>, vector<8x256xf32>
    tpu.vector_store %arg15[%c0_24, %c0_25], %29 {strides = array<i32>} : memref<8x256xf32, #tpu.memory_space<vmem>>, vector<8x256xf32>,
    %c0_26 = arith.constant 0 : index
    %c0_27 = arith.constant 0 : index
    %31 = vector.load %arg15[%c0_26, %c0_27] : memref<8x256xf32, #tpu.memory_space<vmem>>, vector<8x256xf32>
    %32 = vector.extract_strided_slice %18 {offsets = [16, 0], sizes = [8, 256], strides = [1, 1]} : vector<64x256xbf16> to vector<8x256xbf16>
    %c2 = arith.constant 2 : index
    %c0_28 = arith.constant 0 : index
    %c0_29 = arith.constant 0 : index
    %33 = vector.load %arg6[%c2, %c0_28, %c0_29] : memref<8x256x256xbf16, #tpu.memory_space<vmem>>, vector<1x256x256xbf16>
    %34 = vector.shape_cast %33 : vector<1x256x256xbf16> to vector<256x256xbf16>
    %cst_30 = arith.constant dense<0.000000e+00> : vector<8x256xf32>
    %35 = tpu.matmul %32, %34, %cst_30 {dimension_numbers = #tpu.dot_dimension_numbers<[1], [0], [0], [1], [0, 0, 1, 1], [], []>} : vector<8x256xbf16>, vector<256x256xbf16>, vector<8x256xf32> -> vector<8x256xf32>
    %36 = arith.addf %31, %35 : vector<8x256xf32>
    %c0_31 = arith.constant 0 : index
    %c0_32 = arith.constant 0 : index
    %37 = vector.load %arg15[%c0_31, %c0_32] : memref<8x256xf32, #tpu.memory_space<vmem>>, vector<8x256xf32>
    tpu.vector_store %arg15[%c0_31, %c0_32], %36 {strides = array<i32>} : memref<8x256xf32, #tpu.memory_space<vmem>>, vector<8x256xf32>,
    %c0_33 = arith.constant 0 : index
    %c0_34 = arith.constant 0 : index
    %38 = vector.load %arg15[%c0_33, %c0_34] : memref<8x256xf32, #tpu.memory_space<vmem>>, vector<8x256xf32>
    %39 = vector.extract_strided_slice %18 {offsets = [24, 0], sizes = [8, 256], strides = [1, 1]} : vector<64x256xbf16> to vector<8x256xbf16>
    %c3 = arith.constant 3 : index
    %c0_35 = arith.constant 0 : index
    %c0_36 = arith.constant 0 : index
    %40 = vector.load %arg6[%c3, %c0_35, %c0_36] : memref<8x256x256xbf16, #tpu.memory_space<vmem>>, vector<1x256x256xbf16>
    %41 = vector.shape_cast %40 : vector<1x256x256xbf16> to vector<256x256xbf16>
    %cst_37 = arith.constant dense<0.000000e+00> : vector<8x256xf32>
    %42 = tpu.matmul %39, %41, %cst_37 {dimension_numbers = #tpu.dot_dimension_numbers<[1], [0], [0], [1], [0, 0, 1, 1], [], []>} : vector<8x256xbf16>, vector<256x256xbf16>, vector<8x256xf32> -> vector<8x256xf32>
    %43 = arith.addf %38, %42 : vector<8x256xf32>
    %c0_38 = arith.constant 0 : index
    %c0_39 = arith.constant 0 : index
    %44 = vector.load %arg15[%c0_38, %c0_39] : memref<8x256xf32, #tpu.memory_space<vmem>>, vector<8x256xf32>
    tpu.vector_store %arg15[%c0_38, %c0_39], %43 {strides = array<i32>} : memref<8x256xf32, #tpu.memory_space<vmem>>, vector<8x256xf32>,
    %c0_40 = arith.constant 0 : index
    %c0_41 = arith.constant 0 : index
    %45 = vector.load %arg15[%c0_40, %c0_41] : memref<8x256xf32, #tpu.memory_space<vmem>>, vector<8x256xf32>
    %46 = vector.extract_strided_slice %18 {offsets = [32, 0], sizes = [8, 256], strides = [1, 1]} : vector<64x256xbf16> to vector<8x256xbf16>
    %c4 = arith.constant 4 : index
    %c0_42 = arith.constant 0 : index
    %c0_43 = arith.constant 0 : index
    %47 = vector.load %arg6[%c4, %c0_42, %c0_43] : memref<8x256x256xbf16, #tpu.memory_space<vmem>>, vector<1x256x256xbf16>
    %48 = vector.shape_cast %47 : vector<1x256x256xbf16> to vector<256x256xbf16>
    %cst_44 = arith.constant dense<0.000000e+00> : vector<8x256xf32>
    %49 = tpu.matmul %46, %48, %cst_44 {dimension_numbers = #tpu.dot_dimension_numbers<[1], [0], [0], [1], [0, 0, 1, 1], [], []>} : vector<8x256xbf16>, vector<256x256xbf16>, vector<8x256xf32> -> vector<8x256xf32>
    %50 = arith.addf %45, %49 : vector<8x256xf32>
    %c0_45 = arith.constant 0 : index
    %c0_46 = arith.constant 0 : index
    %51 = vector.load %arg15[%c0_45, %c0_46] : memref<8x256xf32, #tpu.memory_space<vmem>>, vector<8x256xf32>
    tpu.vector_store %arg15[%c0_45, %c0_46], %50 {strides = array<i32>} : memref<8x256xf32, #tpu.memory_space<vmem>>, vector<8x256xf32>,
    %c0_47 = arith.constant 0 : index
    %c0_48 = arith.constant 0 : index
    %52 = vector.load %arg15[%c0_47, %c0_48] : memref<8x256xf32, #tpu.memory_space<vmem>>, vector<8x256xf32>
    %53 = vector.extract_strided_slice %18 {offsets = [40, 0], sizes = [8, 256], strides = [1, 1]} : vector<64x256xbf16> to vector<8x256xbf16>
    %c5 = arith.constant 5 : index
    %c0_49 = arith.constant 0 : index
    %c0_50 = arith.constant 0 : index
    %54 = vector.load %arg6[%c5, %c0_49, %c0_50] : memref<8x256x256xbf16, #tpu.memory_space<vmem>>, vector<1x256x256xbf16>
    %55 = vector.shape_cast %54 : vector<1x256x256xbf16> to vector<256x256xbf16>
    %cst_51 = arith.constant dense<0.000000e+00> : vector<8x256xf32>
    %56 = tpu.matmul %53, %55, %cst_51 {dimension_numbers = #tpu.dot_dimension_numbers<[1], [0], [0], [1], [0, 0, 1, 1], [], []>} : vector<8x256xbf16>, vector<256x256xbf16>, vector<8x256xf32> -> vector<8x256xf32>
    %57 = arith.addf %52, %56 : vector<8x256xf32>
    %c0_52 = arith.constant 0 : index
    %c0_53 = arith.constant 0 : index
    %58 = vector.load %arg15[%c0_52, %c0_53] : memref<8x256xf32, #tpu.memory_space<vmem>>, vector<8x256xf32>
    tpu.vector_store %arg15[%c0_52, %c0_53], %57 {strides = array<i32>} : memref<8x256xf32, #tpu.memory_space<vmem>>, vector<8x256xf32>,
    %c0_54 = arith.constant 0 : index
    %c0_55 = arith.constant 0 : index
    %59 = vector.load %arg15[%c0_54, %c0_55] : memref<8x256xf32, #tpu.memory_space<vmem>>, vector<8x256xf32>
    %60 = vector.extract_strided_slice %18 {offsets = [48, 0], sizes = [8, 256], strides = [1, 1]} : vector<64x256xbf16> to vector<8x256xbf16>
    %c6 = arith.constant 6 : index
    %c0_56 = arith.constant 0 : index
    %c0_57 = arith.constant 0 : index
    %61 = vector.load %arg6[%c6, %c0_56, %c0_57] : memref<8x256x256xbf16, #tpu.memory_space<vmem>>, vector<1x256x256xbf16>
    %62 = vector.shape_cast %61 : vector<1x256x256xbf16> to vector<256x256xbf16>
    %cst_58 = arith.constant dense<0.000000e+00> : vector<8x256xf32>
    %63 = tpu.matmul %60, %62, %cst_58 {dimension_numbers = #tpu.dot_dimension_numbers<[1], [0], [0], [1], [0, 0, 1, 1], [], []>} : vector<8x256xbf16>, vector<256x256xbf16>, vector<8x256xf32> -> vector<8x256xf32>
    %64 = arith.addf %59, %63 : vector<8x256xf32>
    %c0_59 = arith.constant 0 : index
    %c0_60 = arith.constant 0 : index
    %65 = vector.load %arg15[%c0_59, %c0_60] : memref<8x256xf32, #tpu.memory_space<vmem>>, vector<8x256xf32>
    tpu.vector_store %arg15[%c0_59, %c0_60], %64 {strides = array<i32>} : memref<8x256xf32, #tpu.memory_space<vmem>>, vector<8x256xf32>,
    %c0_61 = arith.constant 0 : index
    %c0_62 = arith.constant 0 : index
    %66 = vector.load %arg15[%c0_61, %c0_62] : memref<8x256xf32, #tpu.memory_space<vmem>>, vector<8x256xf32>
    %67 = vector.extract_strided_slice %18 {offsets = [56, 0], sizes = [8, 256], strides = [1, 1]} : vector<64x256xbf16> to vector<8x256xbf16>
    %c7 = arith.constant 7 : index
    %c0_63 = arith.constant 0 : index
    %c0_64 = arith.constant 0 : index
    %68 = vector.load %arg6[%c7, %c0_63, %c0_64] : memref<8x256x256xbf16, #tpu.memory_space<vmem>>, vector<1x256x256xbf16>
    %69 = vector.shape_cast %68 : vector<1x256x256xbf16> to vector<256x256xbf16>
    %cst_65 = arith.constant dense<0.000000e+00> : vector<8x256xf32>
    %70 = tpu.matmul %67, %69, %cst_65 {dimension_numbers = #tpu.dot_dimension_numbers<[1], [0], [0], [1], [0, 0, 1, 1], [], []>} : vector<8x256xbf16>, vector<256x256xbf16>, vector<8x256xf32> -> vector<8x256xf32>
    %71 = arith.addf %66, %70 : vector<8x256xf32>
    %c0_66 = arith.constant 0 : index
    %c0_67 = arith.constant 0 : index
    %72 = vector.load %arg15[%c0_66, %c0_67] : memref<8x256xf32, #tpu.memory_space<vmem>>, vector<8x256xf32>
    tpu.vector_store %arg15[%c0_66, %c0_67], %71 {strides = array<i32>} : memref<8x256xf32, #tpu.memory_space<vmem>>, vector<8x256xf32>,
    %c0_68 = arith.constant 0 : index
    %c0_69 = arith.constant 0 : index
    %73 = vector.load %arg15[%c0_68, %c0_69] : memref<8x256xf32, #tpu.memory_space<vmem>>, vector<8x256xf32>
    %c0_70 = arith.constant 0 : index
    %c0_71 = arith.constant 0 : index
    %74 = vector.load %arg7[%c0_70, %c0_71] : memref<1x256xf32, #tpu.memory_space<vmem>>, vector<1x256xf32>
    %75 = vector.broadcast %74 : vector<1x256xf32> to vector<8x256xf32>
    %76 = arith.addf %73, %75 : vector<8x256xf32>
    %cst_72 = arith.constant 0.000000e+00 : f32
    %77 = vector.broadcast %cst_72 : f32 to vector<8x256xf32>
    %78 = arith.maximumf %76, %77 : vector<8x256xf32>
    %79 = arith.truncf %78 : vector<8x256xf32> to vector<8x256xbf16>
    %c0_73 = arith.constant 0 : index
    %c0_74 = arith.constant 0 : index
    %80 = vector.load %arg8[%c0_73, %c0_74] : memref<256x256xbf16, #tpu.memory_space<vmem>>, vector<256x256xbf16>
    %cst_75 = arith.constant dense<0.000000e+00> : vector<8x256xf32>
    %81 = tpu.matmul %79, %80, %cst_75 {dimension_numbers = #tpu.dot_dimension_numbers<[1], [0], [0], [1], [0, 0, 1, 1], [], []>} : vector<8x256xbf16>, vector<256x256xbf16>, vector<8x256xf32> -> vector<8x256xf32>
    %c0_76 = arith.constant 0 : index
    %c0_77 = arith.constant 0 : index
    %82 = vector.load %arg9[%c0_76, %c0_77] : memref<1x256xf32, #tpu.memory_space<vmem>>, vector<1x256xf32>
    %83 = vector.broadcast %82 : vector<1x256xf32> to vector<8x256xf32>
    %84 = arith.addf %81, %83 : vector<8x256xf32>
    %cst_78 = arith.constant 0.000000e+00 : f32
    %85 = vector.broadcast %cst_78 : f32 to vector<8x256xf32>
    %86 = arith.maximumf %84, %85 : vector<8x256xf32>
    %87 = arith.truncf %86 : vector<8x256xf32> to vector<8x256xbf16>
    %c0_79 = arith.constant 0 : index
    %c0_80 = arith.constant 0 : index
    %88 = vector.load %arg10[%c0_79, %c0_80] : memref<256x128xbf16, #tpu.memory_space<vmem>>, vector<256x128xbf16>
    %cst_81 = arith.constant dense<0.000000e+00> : vector<8x128xf32>
    %89 = tpu.matmul %87, %88, %cst_81 {dimension_numbers = #tpu.dot_dimension_numbers<[1], [0], [0], [1], [0, 0, 1, 1], [], []>} : vector<8x256xbf16>, vector<256x128xbf16>, vector<8x128xf32> -> vector<8x128xf32>
    %c0_82 = arith.constant 0 : index
    %c0_83 = arith.constant 0 : index
    %90 = vector.load %arg11[%c0_82, %c0_83] : memref<1x128xf32, #tpu.memory_space<vmem>>, vector<1x128xf32>
    %91 = vector.broadcast %90 : vector<1x128xf32> to vector<8x128xf32>
    %92 = arith.addf %89, %91 : vector<8x128xf32>
    %cst_84 = arith.constant 0.000000e+00 : f32
    %93 = vector.broadcast %cst_84 : f32 to vector<8x128xf32>
    %94 = arith.maximumf %92, %93 : vector<8x128xf32>
    %95 = arith.truncf %94 : vector<8x128xf32> to vector<8x128xbf16>
    %c0_85 = arith.constant 0 : index
    %c0_86 = arith.constant 0 : index
    %96 = vector.load %arg12[%c0_85, %c0_86] : memref<128x128xbf16, #tpu.memory_space<vmem>>, vector<128x128xbf16>
    %cst_87 = arith.constant dense<0.000000e+00> : vector<8x128xf32>
    %97 = tpu.matmul %95, %96, %cst_87 {dimension_numbers = #tpu.dot_dimension_numbers<[1], [0], [0], [1], [0, 0, 1, 1], [], []>} : vector<8x128xbf16>, vector<128x128xbf16>, vector<8x128xf32> -> vector<8x128xf32>
    %c0_88 = arith.constant 0 : index
    %c0_89 = arith.constant 0 : index
    %98 = vector.load %arg13[%c0_88, %c0_89] : memref<1x128xf32, #tpu.memory_space<vmem>>, vector<1x128xf32>
    %99 = vector.broadcast %98 : vector<1x128xf32> to vector<8x128xf32>
    %100 = arith.addf %97, %99 : vector<8x128xf32>
    %c0_90 = arith.constant 0 : index
    %c0_91 = arith.constant 0 : index
    %101 = vector.load %arg14[%c0_90, %c0_91] : memref<8x128xf32, #tpu.memory_space<vmem>>, vector<8x128xf32>
    tpu.vector_store %arg14[%c0_90, %c0_91], %100 {strides = array<i32>} : memref<8x128xf32, #tpu.memory_space<vmem>>, vector<8x128xf32>,
    return
  }
  func.func @transform_0(%arg0: i32) -> (i32, i32, i32) {
    %c0_i32 = arith.constant 0 : i32
    %c0_i32_0 = arith.constant 0 : i32
    %c0_i32_1 = arith.constant 0 : i32
    return %arg0, %c0_i32, %c0_i32_0 : i32, i32, i32
  }
  func.func @transform_1(%arg0: i32) -> (i32, i32) {
    %c0_i32 = arith.constant 0 : i32
    %c0_i32_0 = arith.constant 0 : i32
    %c0_i32_1 = arith.constant 0 : i32
    return %c0_i32, %c0_i32_0 : i32, i32
  }
  func.func @transform_2(%arg0: i32) -> (i32, i32) {
    %c0_i32 = arith.constant 0 : i32
    %c0_i32_0 = arith.constant 0 : i32
    %c0_i32_1 = arith.constant 0 : i32
    return %c0_i32, %c0_i32_0 : i32, i32
  }
  func.func @transform_3(%arg0: i32) -> (i32, i32) {
    %c0_i32 = arith.constant 0 : i32
    %c0_i32_0 = arith.constant 0 : i32
    %c0_i32_1 = arith.constant 0 : i32
    return %c0_i32, %c0_i32_0 : i32, i32
  }
  func.func @transform_4(%arg0: i32) -> (i32, i32) {
    %c0_i32 = arith.constant 0 : i32
    %c0_i32_0 = arith.constant 0 : i32
    %c0_i32_1 = arith.constant 0 : i32
    return %c0_i32, %c0_i32_0 : i32, i32
  }
  func.func @transform_5(%arg0: i32) -> (i32, i32, i32) {
    %c0_i32 = arith.constant 0 : i32
    %c0_i32_0 = arith.constant 0 : i32
    %c0_i32_1 = arith.constant 0 : i32
    %c0_i32_2 = arith.constant 0 : i32
    return %c0_i32, %c0_i32_0, %c0_i32_1 : i32, i32, i32
  }
  func.func @transform_6(%arg0: i32) -> (i32, i32) {
    %c0_i32 = arith.constant 0 : i32
    %c0_i32_0 = arith.constant 0 : i32
    %c0_i32_1 = arith.constant 0 : i32
    return %c0_i32, %c0_i32_0 : i32, i32
  }
  func.func @transform_7(%arg0: i32) -> (i32, i32) {
    %c0_i32 = arith.constant 0 : i32
    %c0_i32_0 = arith.constant 0 : i32
    %c0_i32_1 = arith.constant 0 : i32
    return %c0_i32, %c0_i32_0 : i32, i32
  }
  func.func @transform_8(%arg0: i32) -> (i32, i32) {
    %c0_i32 = arith.constant 0 : i32
    %c0_i32_0 = arith.constant 0 : i32
    %c0_i32_1 = arith.constant 0 : i32
    return %c0_i32, %c0_i32_0 : i32, i32
  }
  func.func @transform_9(%arg0: i32) -> (i32, i32) {
    %c0_i32 = arith.constant 0 : i32
    %c0_i32_0 = arith.constant 0 : i32
    %c0_i32_1 = arith.constant 0 : i32
    return %c0_i32, %c0_i32_0 : i32, i32
  }
  func.func @transform_10(%arg0: i32) -> (i32, i32) {
    %c0_i32 = arith.constant 0 : i32
    %c0_i32_0 = arith.constant 0 : i32
    %c0_i32_1 = arith.constant 0 : i32
    return %c0_i32, %c0_i32_0 : i32, i32
  }
  func.func @transform_11(%arg0: i32) -> (i32, i32) {
    %c0_i32 = arith.constant 0 : i32
    %c0_i32_0 = arith.constant 0 : i32
    %c0_i32_1 = arith.constant 0 : i32
    return %c0_i32, %c0_i32_0 : i32, i32
  }
  func.func @transform_12(%arg0: i32) -> (i32, i32) {
    %c0_i32 = arith.constant 0 : i32
    %c0_i32_0 = arith.constant 0 : i32
    %c0_i32_1 = arith.constant 0 : i32
    return %c0_i32, %c0_i32_0 : i32, i32
  }
  func.func @transform_13(%arg0: i32) -> (i32, i32) {
    %c0_i32 = arith.constant 0 : i32
    %c0_i32_0 = arith.constant 0 : i32
    return %arg0, %c0_i32 : i32, i32
  }
}

</mosaic_0001>

<llo_original>
// kernel: cnn_model_bn_forward.1
$region0: #{cnn_model_bn_forward.1}
  #allocation0 [shape = 'u32[]', space=smem, size = 0x4, offset = 0x4, fixed_abs, tag = 'smem constant byte address 0x4 - core index']
  #allocation1 [shape = 'u32[72,128]{1,0:T(1,128)}', space=vmem, size = 0x9000, scoped, tag = 'internal scratch']
  #allocation2 [shape = 'f32[8,256]{1,0:T(8,128)}', space=vmem, size = 0x2000, scoped, tag = 'scratch operand']
  %s0 = inlined_call_operand.vmem [shape: f32[1,64,4], index: 0, kind: input, shape index: {}]
  %s1 = inlined_call_operand.vmem [shape: bf16[4,128], index: 1, kind: input, shape index: {}]
  %s2 = inlined_call_operand.vmem [shape: f32[1,128], index: 2, kind: input, shape index: {}]
  %s3 = inlined_call_operand.hbm [shape: bf16[128,256], index: 3, kind: input, shape index: {}]
  %s4 = inlined_call_operand.vmem [shape: f32[1,256], index: 4, kind: input, shape index: {}]
  %s5 = inlined_call_operand.hbm [shape: bf16[8,256,256], index: 5, kind: input, shape index: {}]
  %s6 = inlined_call_operand.vmem [shape: f32[1,256], index: 6, kind: input, shape index: {}]
  %s7 = inlined_call_operand.hbm [shape: bf16[256,256], index: 7, kind: input, shape index: {}]
  %s8 = inlined_call_operand.vmem [shape: f32[1,256], index: 8, kind: input, shape index: {}]
  %s9 = inlined_call_operand.hbm [shape: bf16[256,128], index: 9, kind: input, shape index: {}]
  %s10 = inlined_call_operand.vmem [shape: f32[1,128], index: 10, kind: input, shape index: {}]
  %s11 = inlined_call_operand.vmem [shape: bf16[128,128], index: 11, kind: input, shape index: {}]
  %s12 = inlined_call_operand.vmem [shape: f32[1,128], index: 12, kind: input, shape index: {}]
  %s13 = inlined_call_operand.vmem [shape: f32[8,128], index: 13, kind: output, shape index: {}]
  %s14 = sld [smem:[#allocation0]]
  $region78: #{cnn_model_bn_forward.1} parent=0
    _
  %s16 = ssub.s32 1, %s14
  %s17 = scalar_select 0, %s16, %s14
  $region1: #{cnn_model_bn_forward.1} parent=0
    #allocation3 [shape = 'u8[65536]{0}', space=vmem, size = 0x10000, scoped, tag = 'input window, operand 3, single buffered']
    #allocation4 [shape = 's32[1]{0}', space=sflag, size = 0x4, scoped, tag = 'scoped memory for cnn_model_bn_forward.1']
    #allocation5 [shape = 'u8[1048576]{0}', space=vmem, size = 0x100000, scoped, tag = 'input window, operand 5, single buffered']
    #allocation6 [shape = 's32[1]{0}', space=sflag, size = 0x4, scoped, tag = 'scoped memory for cnn_model_bn_forward.1']
    #allocation7 [shape = 'u8[131072]{0}', space=vmem, size = 0x20000, scoped, tag = 'input window, operand 7, single buffered']
    #allocation8 [shape = 'u8[65536]{0}', space=vmem, size = 0x10000, scoped, tag = 'input window, operand 9, single buffered']
    #allocation9 [shape = 's32[1]{0}', space=sflag, size = 0x4, scoped, tag = 'scoped memory for cnn_model_bn_forward.1']
    %18 = vsyncpa [#allocation4], 0
    %19 = vsyncpa [#allocation6], 0
    %20 = vsyncpa [#allocation9], 0
    // Predicated region
    $region2: #{cnn_model_bn_forward.1} parent=1 // pred_check
      _
    $region3: #{cnn_model_bn_forward.1} parent=1 // pred_check_branch
      %22 = sbr.rel (0) target = $region5
    $region4: #{cnn_model_bn_forward.1} parent=1 // pred_region
      _
    $region5: #{cnn_model_bn_forward.1} parent=1 // pred_fallthru
      _
    // Predicated region
    $region6: #{cnn_model_bn_forward.1} parent=1 // pred_check
      _
    $region7: #{cnn_model_bn_forward.1} parent=1 // pred_check_branch
      %24 = sbr.rel (0) target = $region9
    $region8: #{cnn_model_bn_forward.1} parent=1 // pred_region
      _
    $region9: #{cnn_model_bn_forward.1} parent=1 // pred_fallthru
      _
    // Predicated region
    $region10: #{cnn_model_bn_forward.1} parent=1 // pred_check
      _
    $region11: #{cnn_model_bn_forward.1} parent=1 // pred_check_branch
      %26 = sbr.rel (0) target = $region13
    $region12: #{cnn_model_bn_forward.1} parent=1 // pred_region
      _
    $region13: #{cnn_model_bn_forward.1} parent=1 // pred_fallthru
      _
    // Predicated region
    $region14: #{cnn_model_bn_forward.1} parent=1 // pred_check
      _
    $region15: #{cnn_model_bn_forward.1} parent=1 // pred_check_branch
      %28 = sbr.rel (0) target = $region17
    $region16: #{cnn_model_bn_forward.1} parent=1 // pred_region
      %30 = vsyncadd [#allocation4], 0
      %s31 = sshll.u32 %s3, 4
      %s32 = int_to_ptr.hbm [resolvable:$true] %s31
      %s33 = sshll.u32 [#allocation3], 4
      %s34 = int_to_ptr.vmem [resolvable:$true] %s33
      %39 = dma.hbm_to_vmem [thread:$0]  %s32, 2048, %s34, [#allocation4], 128, 128, 8
    $region17: #{cnn_model_bn_forward.1} parent=1 // pred_fallthru
      _
    // Predicated region
    $region18: #{cnn_model_bn_forward.1} parent=1 // pred_check
      _
    $region19: #{cnn_model_bn_forward.1} parent=1 // pred_check_branch
      %41 = sbr.rel (0) target = $region21
    $region20: #{cnn_model_bn_forward.1} parent=1 // pred_region
      _
    $region21: #{cnn_model_bn_forward.1} parent=1 // pred_fallthru
      _
    // Predicated region
    $region22: #{cnn_model_bn_forward.1} parent=1 // pred_check
      _
    $region23: #{cnn_model_bn_forward.1} parent=1 // pred_check_branch
      %43 = sbr.rel (0) target = $region25
    $region24: #{cnn_model_bn_forward.1} parent=1 // pred_region
      %45 = vsyncadd [#allocation6], 0
      %s46 = sshll.u32 %s5, 4
      %s47 = int_to_ptr.hbm [resolvable:$true] %s46
      %s48 = sshll.u32 [#allocation5], 4
      %s49 = int_to_ptr.vmem [resolvable:$true] %s48
      %54 = dma.hbm_to_vmem [thread:$0]  %s47, 32768, %s49, [#allocation6], 128, 128, 8
    $region25: #{cnn_model_bn_forward.1} parent=1 // pred_fallthru
      _
    // Predicated region
    $region26: #{cnn_model_bn_forward.1} parent=1 // pred_check
      _
    $region27: #{cnn_model_bn_forward.1} parent=1 // pred_check_branch
      %56 = sbr.rel (0) target = $region29
    $region28: #{cnn_model_bn_forward.1} parent=1 // pred_region
      _
    $region29: #{cnn_model_bn_forward.1} parent=1 // pred_fallthru
      _
    // Predicated region
    $region30: #{cnn_model_bn_forward.1} parent=1 // pred_check
      _
    $region31: #{cnn_model_bn_forward.1} parent=1 // pred_check_branch
      %58 = sbr.rel (0) target = $region33
    $region32: #{cnn_model_bn_forward.1} parent=1 // pred_region
      %60 = vsyncadd [#allocation6], 0
      %s61 = sshll.u32 %s7, 4
      %s62 = int_to_ptr.hbm [resolvable:$true] %s61
      %s63 = sshll.u32 [#allocation7], 4
      %s64 = int_to_ptr.vmem [resolvable:$true] %s63
      %69 = dma.hbm_to_vmem [thread:$0]  %s62, 4096, %s64, [#allocation6], 128, 128, 8
    $region33: #{cnn_model_bn_forward.1} parent=1 // pred_fallthru
      _
    // Predicated region
    $region34: #{cnn_model_bn_forward.1} parent=1 // pred_check
      _
    $region35: #{cnn_model_bn_forward.1} parent=1 // pred_check_branch
      %71 = sbr.rel (0) target = $region37
    $region36: #{cnn_model_bn_forward.1} parent=1 // pred_region
      _
    $region37: #{cnn_model_bn_forward.1} parent=1 // pred_fallthru
      _
    // Predicated region
    $region38: #{cnn_model_bn_forward.1} parent=1 // pred_check
      _
    $region39: #{cnn_model_bn_forward.1} parent=1 // pred_check_branch
      %73 = sbr.rel (0) target = $region41
    $region40: #{cnn_model_bn_forward.1} parent=1 // pred_region
      %75 = vsyncadd [#allocation9], 0
      %s76 = sshll.u32 %s9, 4
      %s77 = int_to_ptr.hbm [resolvable:$true] %s76
      %s78 = sshll.u32 [#allocation8], 4
      %s79 = int_to_ptr.vmem [resolvable:$true] %s78
      %84 = dma.hbm_to_vmem [thread:$0]  %s77, 2048, %s79, [#allocation9], 64, 64, 4
    $region41: #{cnn_model_bn_forward.1} parent=1 // pred_fallthru
      _
    // Predicated region
    $region42: #{cnn_model_bn_forward.1} parent=1 // pred_check
      _
    $region43: #{cnn_model_bn_forward.1} parent=1 // pred_check_branch
      %86 = sbr.rel (0) target = $region45
    $region44: #{cnn_model_bn_forward.1} parent=1 // pred_region
      _
    $region45: #{cnn_model_bn_forward.1} parent=1 // pred_fallthru
      _
    // Predicated region
    $region46: #{cnn_model_bn_forward.1} parent=1 // pred_check
      _
    $region47: #{cnn_model_bn_forward.1} parent=1 // pred_check_branch
      %88 = sbr.rel (0) target = $region49
    $region48: #{cnn_model_bn_forward.1} parent=1 // pred_region
      _
    $region49: #{cnn_model_bn_forward.1} parent=1 // pred_fallthru
      _
    // Predicated region
    $region50: #{cnn_model_bn_forward.1} parent=1 // pred_check
      _
    $region51: #{cnn_model_bn_forward.1} parent=1 // pred_check_branch
      %90 = sbr.rel (0) target = $region53
    $region52: #{cnn_model_bn_forward.1} parent=1 // pred_region
      _
    $region53: #{cnn_model_bn_forward.1} parent=1 // pred_fallthru
      _
    // Predicated region
    $region54: #{cnn_model_bn_forward.1} parent=1 // pred_check
      _
    $region55: #{cnn_model_bn_forward.1} parent=1 // pred_check_branch
      %92 = sbr.rel (0) target = $region57
    $region56: #{cnn_model_bn_forward.1} parent=1 // pred_region
      %94 = dma.done [#allocation4], 2048
    $region57: #{cnn_model_bn_forward.1} parent=1 // pred_fallthru
      _
    // Predicated region
    $region58: #{cnn_model_bn_forward.1} parent=1 // pred_check
      _
    $region59: #{cnn_model_bn_forward.1} parent=1 // pred_check_branch
      %96 = sbr.rel (0) target = $region61
    $region60: #{cnn_model_bn_forward.1} parent=1 // pred_region
      %98 = dma.done [#allocation6], 32768
    $region61: #{cnn_model_bn_forward.1} parent=1 // pred_fallthru
      _
    // Predicated region
    $region62: #{cnn_model_bn_forward.1} parent=1 // pred_check
      _
    $region63: #{cnn_model_bn_forward.1} parent=1 // pred_check_branch
      %100 = sbr.rel (0) target = $region65
    $region64: #{cnn_model_bn_forward.1} parent=1 // pred_region
      %102 = dma.done [#allocation6], 4096
    $region65: #{cnn_model_bn_forward.1} parent=1 // pred_fallthru
      _
    // Predicated region
    $region66: #{cnn_model_bn_forward.1} parent=1 // pred_check
      _
    $region67: #{cnn_model_bn_forward.1} parent=1 // pred_check_branch
      %104 = sbr.rel (0) target = $region69
    $region68: #{cnn_model_bn_forward.1} parent=1 // pred_region
      %106 = dma.done [#allocation9], 2048
    $region69: #{cnn_model_bn_forward.1} parent=1 // pred_fallthru
      _
    %v108 = vld [vmem:[%s0] sm:$0xff]
    %v109 = vld [vmem:[%s0 + $0x8] sm:$0xff]
    %v110 = vld [vmem:[%s0 + $0x10] sm:$0xff]
    %v111 = vld [vmem:[%s0 + $0x18] sm:$0xff]
    %v112 = vld [vmem:[%s0 + $0x20] sm:$0xff]
    %v113 = vld [vmem:[%s0 + $0x28] sm:$0xff]
    %v114 = vld [vmem:[%s0 + $0x30] sm:$0xff]
    %v115 = vld [vmem:[%s0 + $0x38] sm:$0xff]
    %v116 = vpack.c.bf16 %v109, %v108
    %v117 = vpack.c.bf16 %v111, %v110
    %v118 = vpack.c.bf16 %v113, %v112
    %v119 = vpack.c.bf16 %v115, %v114
    %v120 = vld [vmem:[%s1] sm:$0x3]
    %v121 = vld [vmem:[%s2] sm:$0x1]
    %v123 = vperm.slane %v121, 0
    %vm125 = vcmask 31744
    %v127 = vsel %vm125, %v116, 0
    %v130 = vsel %vm125, %v117, 0
    %v133 = vsel %vm125, %v118, 0
    %v136 = vsel %vm125, %v119, 0
    %vm138 = vcmask 1041408
    %v140 = vsel %vm138, %v120, 0
    %142 = vmatpush.bf16.msra.mxu0 0
    %143 = vmatpush.bf16.msra.mxu0 0
    %144 = vmatpush.bf16.msra.mxu0 0
    %145 = vmatpush.bf16.msra.mxu0 0
    %146 = vmatpush.bf16.msra.mxu0 0
    %147 = vmatpush.bf16.msra.mxu0 0
    %148 = vmatpush.bf16.msra.mxu0 0
    %149 = vmatpush.bf16.msra.mxu0 %v140
    %150 = vmatmul.bf16.gmra.mxu0 %v127
    %v151 = vpop.f32.mrf.mxu0
    %v152 = vadd.f32 %v123, %v151
    %v153 = vpop.f32.mrf.mxu0
    %v154 = vadd.f32 %v123, %v153
    %155 = vmatmul.bf16.gmra.mxu0 %v130
    %v156 = vpop.f32.mrf.mxu0
    %v157 = vadd.f32 %v123, %v156
    %v158 = vpop.f32.mrf.mxu0
    %v159 = vadd.f32 %v123, %v158
    %160 = vmatmul.bf16.gmra.mxu0 %v133
    %v161 = vpop.f32.mrf.mxu0
    %v162 = vadd.f32 %v123, %v161
    %v163 = vpop.f32.mrf.mxu0
    %v164 = vadd.f32 %v123, %v163
    %165 = vmatmul.bf16.gmra.mxu0 %v136
    %v166 = vpop.f32.mrf.mxu0
    %v167 = vadd.f32 %v123, %v166
    %v168 = vpop.f32.mrf.mxu0
    %v169 = vadd.f32 %v123, %v168
    %170 = vdwg.mxu0
    %v171 = vmax.f32 %v152, 0.0
    %v172 = vmax.f32 %v154, 0.0
    %v173 = vmax.f32 %v157, 0.0
    %v174 = vmax.f32 %v159, 0.0
    %v175 = vmax.f32 %v162, 0.0
    %v176 = vmax.f32 %v164, 0.0
    %v177 = vmax.f32 %v167, 0.0
    %v178 = vmax.f32 %v169, 0.0
    %v179 = vpack.c.bf16 %v172, %v171
    %v180 = vpack.c.bf16 %v174, %v173
    %v181 = vpack.c.bf16 %v176, %v175
    %v182 = vpack.c.bf16 %v178, %v177
    %v183 = vld [vmem:[#allocation3] sm:$0xff]
    %v184 = vld [vmem:[#allocation3 + $0x8] sm:$0xff]
    %v185 = vld [vmem:[#allocation3 + $0x10] sm:$0xff]
    %v186 = vld [vmem:[#allocation3 + $0x18] sm:$0xff]
    %v187 = vld [vmem:[#allocation3 + $0x20] sm:$0xff]
    %v188 = vld [vmem:[#allocation3 + $0x28] sm:$0xff]
    %v189 = vld [vmem:[#allocation3 + $0x30] sm:$0xff]
    %v190 = vld [vmem:[#allocation3 + $0x38] sm:$0xff]
    %v191 = vld [vmem:[#allocation3 + $0x40] sm:$0xff]
    %v192 = vld [vmem:[#allocation3 + $0x48] sm:$0xff]
    %v193 = vld [vmem:[#allocation3 + $0x50] sm:$0xff]
    %v194 = vld [vmem:[#allocation3 + $0x58] sm:$0xff]
    %v195 = vld [vmem:[#allocation3 + $0x60] sm:$0xff]
    %v196 = vld [vmem:[#allocation3 + $0x68] sm:$0xff]
    %v197 = vld [vmem:[#allocation3 + $0x70] sm:$0xff]
    %v198 = vld [vmem:[#allocation3 + $0x78] sm:$0xff]
    %v199 = vld [vmem:[%s4] sm:$0x3]
    %v201 = vperm.slane %v199, 0
    %v202 = vperm.slane %v199, 1
    %v221 = vunpack.c.l.b16 %v183
    %v222 = vunpack.c.h.b16 %v183
    %v223 = vunpack.c.l.b16 %v184
    %v224 = vunpack.c.h.b16 %v184
    %v225 = vunpack.c.l.b16 %v185
    %v226 = vunpack.c.h.b16 %v185
    %v227 = vunpack.c.l.b16 %v186
    %v228 = vunpack.c.h.b16 %v186
    %v229 = vunpack.c.l.b16 %v187
    %v230 = vunpack.c.h.b16 %v187
    %v231 = vunpack.c.l.b16 %v188
    %v232 = vunpack.c.h.b16 %v188
    %v233 = vunpack.c.l.b16 %v189
    %v234 = vunpack.c.h.b16 %v189
    %v235 = vunpack.c.l.b16 %v190
    %v236 = vunpack.c.h.b16 %v190
    %v237 = vunpack.c.l.b16 %v191
    %v238 = vunpack.c.h.b16 %v191
    %v239 = vunpack.c.l.b16 %v192
    %v240 = vunpack.c.h.b16 %v192
    %v241 = vunpack.c.l.b16 %v193
    %v242 = vunpack.c.h.b16 %v193
    %v243 = vunpack.c.l.b16 %v194
    %v244 = vunpack.c.h.b16 %v194
    %v245 = vunpack.c.l.b16 %v195
    %v246 = vunpack.c.h.b16 %v195
    %v247 = vunpack.c.l.b16 %v196
    %v248 = vunpack.c.h.b16 %v196
    %v249 = vunpack.c.l.b16 %v197
    %v250 = vunpack.c.h.b16 %v197
    %v251 = vunpack.c.l.b16 %v198
    %v252 = vunpack.c.h.b16 %v198
    %v253 = vpack.c.b16 %v223, %v221
    %v254 = vpack.c.b16 %v224, %v222
    %v255 = vpack.c.b16 %v227, %v225
    %v256 = vpack.c.b16 %v228, %v226
    %v257 = vpack.c.b16 %v231, %v229
    %v258 = vpack.c.b16 %v232, %v230
    %v259 = vpack.c.b16 %v235, %v233
    %v260 = vpack.c.b16 %v236, %v234
    %v261 = vpack.c.b16 %v239, %v237
    %v262 = vpack.c.b16 %v240, %v238
    %v263 = vpack.c.b16 %v243, %v241
    %v264 = vpack.c.b16 %v244, %v242
    %v265 = vpack.c.b16 %v247, %v245
    %v266 = vpack.c.b16 %v248, %v246
    %v267 = vpack.c.b16 %v251, %v249
    %v268 = vpack.c.b16 %v252, %v250
    %285 = vmatpush.bf16.msra.mxu0 %v267
    %286 = vmatpush.bf16.msra.mxu0 %v265
    %287 = vmatpush.bf16.msra.mxu0 %v263
    %288 = vmatpush.bf16.msra.mxu0 %v261
    %289 = vmatpush.bf16.msra.mxu0 %v259
    %290 = vmatpush.bf16.msra.mxu0 %v257
    %291 = vmatpush.bf16.msra.mxu0 %v255
    %292 = vmatpush.bf16.msra.mxu0 %v253
    %293 = vmatmul.bf16.gmra.mxu0 %v179
    %v294 = vpop.f32.mrf.mxu0
    %v295 = vadd.f32 %v201, %v294
    %v296 = vpop.f32.mrf.mxu0
    %v297 = vadd.f32 %v201, %v296
    %298 = vmatmul.bf16.gmra.mxu0 %v180
    %v299 = vpop.f32.mrf.mxu0
    %v300 = vadd.f32 %v201, %v299
    %v301 = vpop.f32.mrf.mxu0
    %v302 = vadd.f32 %v201, %v301
    %303 = vmatmul.bf16.gmra.mxu0 %v181
    %v304 = vpop.f32.mrf.mxu0
    %v305 = vadd.f32 %v201, %v304
    %v306 = vpop.f32.mrf.mxu0
    %v307 = vadd.f32 %v201, %v306
    %308 = vmatmul.bf16.gmra.mxu0 %v182
    %v309 = vpop.f32.mrf.mxu0
    %v310 = vadd.f32 %v201, %v309
    %v311 = vpop.f32.mrf.mxu0
    %v312 = vadd.f32 %v201, %v311
    %313 = vdwg.mxu0
    %314 = vmatpush.bf16.msra.mxu0 %v268
    %315 = vmatpush.bf16.msra.mxu0 %v266
    %316 = vmatpush.bf16.msra.mxu0 %v264
    %317 = vmatpush.bf16.msra.mxu0 %v262
    %318 = vmatpush.bf16.msra.mxu0 %v260
    %319 = vmatpush.bf16.msra.mxu0 %v258
    %320 = vmatpush.bf16.msra.mxu0 %v256
    %321 = vmatpush.bf16.msra.mxu0 %v254
    %322 = vmatmul.bf16.gmra.mxu0 %v179
    %v323 = vpop.f32.mrf.mxu0
    %v324 = vadd.f32 %v202, %v323
    %v325 = vpop.f32.mrf.mxu0
    %v326 = vadd.f32 %v202, %v325
    %327 = vmatmul.bf16.gmra.mxu0 %v180
    %v328 = vpop.f32.mrf.mxu0
    %v329 = vadd.f32 %v202, %v328
    %v330 = vpop.f32.mrf.mxu0
    %v331 = vadd.f32 %v202, %v330
    %332 = vmatmul.bf16.gmra.mxu0 %v181
    %v333 = vpop.f32.mrf.mxu0
    %v334 = vadd.f32 %v202, %v333
    %v335 = vpop.f32.mrf.mxu0
    %v336 = vadd.f32 %v202, %v335
    %337 = vmatmul.bf16.gmra.mxu0 %v182
    %v338 = vpop.f32.mrf.mxu0
    %v339 = vadd.f32 %v202, %v338
    %v340 = vpop.f32.mrf.mxu0
    %v341 = vadd.f32 %v202, %v340
    %342 = vdwg.mxu0
    %v343 = vmax.f32 %v295, 0.0
    %v344 = vmax.f32 %v324, 0.0
    %v345 = vmax.f32 %v297, 0.0
    %v346 = vmax.f32 %v326, 0.0
    %v347 = vmax.f32 %v300, 0.0
    %v348 = vmax.f32 %v329, 0.0
    %v349 = vmax.f32 %v302, 0.0
    %v350 = vmax.f32 %v331, 0.0
    %v351 = vmax.f32 %v305, 0.0
    %v352 = vmax.f32 %v334, 0.0
    %v353 = vmax.f32 %v307, 0.0
    %v354 = vmax.f32 %v336, 0.0
    %v355 = vmax.f32 %v310, 0.0
    %v356 = vmax.f32 %v339, 0.0
    %v357 = vmax.f32 %v312, 0.0
    %v358 = vmax.f32 %v341, 0.0
    %v359 = vpack.c.bf16 %v344, %v343
    %v360 = vpack.c.bf16 %v346, %v345
    %v361 = vpack.c.bf16 %v348, %v347
    %v362 = vpack.c.bf16 %v350, %v349
    %v363 = vpack.c.bf16 %v352, %v351
    %v364 = vpack.c.bf16 %v354, %v353
    %v365 = vpack.c.bf16 %v356, %v355
    %v366 = vpack.c.bf16 %v358, %v357
    %v367 = vld [vmem:[#allocation5] sm:$0xff]
    %v368 = vld [vmem:[#allocation5 + $0x8] sm:$0xff]
    %v369 = vld [vmem:[#allocation5 + $0x10] sm:$0xff]
    %v370 = vld [vmem:[#allocation5 + $0x18] sm:$0xff]
    %v371 = vld [vmem:[#allocation5 + $0x20] sm:$0xff]
    %v372 = vld [vmem:[#allocation5 + $0x28] sm:$0xff]
    %v373 = vld [vmem:[#allocation5 + $0x30] sm:$0xff]
    %v374 = vld [vmem:[#allocation5 + $0x38] sm:$0xff]
    %v375 = vld [vmem:[#allocation5 + $0x40] sm:$0xff]
    %v376 = vld [vmem:[#allocation5 + $0x48] sm:$0xff]
    %v377 = vld [vmem:[#allocation5 + $0x50] sm:$0xff]
    %v378 = vld [vmem:[#allocation5 + $0x58] sm:$0xff]
    %v379 = vld [vmem:[#allocation5 + $0x60] sm:$0xff]
    %v380 = vld [vmem:[#allocation5 + $0x68] sm:$0xff]
    %v381 = vld [vmem:[#allocation5 + $0x70] sm:$0xff]
    %v382 = vld [vmem:[#allocation5 + $0x78] sm:$0xff]
    %v383 = vld [vmem:[#allocation5 + $0x80] sm:$0xff]
    %v384 = vld [vmem:[#allocation5 + $0x88] sm:$0xff]
    %v385 = vld [vmem:[#allocation5 + $0x90] sm:$0xff]
    %v386 = vld [vmem:[#allocation5 + $0x98] sm:$0xff]
    %v387 = vld [vmem:[#allocation5 + $0xa0] sm:$0xff]
    %v388 = vld [vmem:[#allocation5 + $0xa8] sm:$0xff]
    %v389 = vld [vmem:[#allocation5 + $0xb0] sm:$0xff]
    %v390 = vld [vmem:[#allocation5 + $0xb8] sm:$0xff]
    %v391 = vld [vmem:[#allocation5 + $0xc0] sm:$0xff]
    %v392 = vld [vmem:[#allocation5 + $0xc8] sm:$0xff]
    %v393 = vld [vmem:[#allocation5 + $0xd0] sm:$0xff]
    %v394 = vld [vmem:[#allocation5 + $0xd8] sm:$0xff]
    %v395 = vld [vmem:[#allocation5 + $0xe0] sm:$0xff]
    %v396 = vld [vmem:[#allocation5 + $0xe8] sm:$0xff]
    %v397 = vld [vmem:[#allocation5 + $0xf0] sm:$0xff]
    %v398 = vld [vmem:[#allocation5 + $0xf8] sm:$0xff]
    %v400 = vunpack.c.l.b16 %v359
    %v401 = vunpack.c.h.b16 %v359
    %v402 = vpack.c.b16 %v400, %v400
    %v403 = vpack.c.b16 %v401, %v401
    %v438 = vunpack.c.l.b16 %v367
    %v439 = vunpack.c.h.b16 %v367
    %v440 = vunpack.c.l.b16 %v368
    %v441 = vunpack.c.h.b16 %v368
    %v442 = vunpack.c.l.b16 %v369
    %v443 = vunpack.c.h.b16 %v369
    %v444 = vunpack.c.l.b16 %v370
    %v445 = vunpack.c.h.b16 %v370
    %v446 = vunpack.c.l.b16 %v371
    %v447 = vunpack.c.h.b16 %v371
    %v448 = vunpack.c.l.b16 %v372
    %v449 = vunpack.c.h.b16 %v372
    %v450 = vunpack.c.l.b16 %v373
    %v451 = vunpack.c.h.b16 %v373
    %v452 = vunpack.c.l.b16 %v374
    %v453 = vunpack.c.h.b16 %v374
    %v454 = vunpack.c.l.b16 %v375
    %v455 = vunpack.c.h.b16 %v375
    %v456 = vunpack.c.l.b16 %v376
    %v457 = vunpack.c.h.b16 %v376
    %v458 = vunpack.c.l.b16 %v377
    %v459 = vunpack.c.h.b16 %v377
    %v460 = vunpack.c.l.b16 %v378
    %v461 = vunpack.c.h.b16 %v378
    %v462 = vunpack.c.l.b16 %v379
    %v463 = vunpack.c.h.b16 %v379
    %v464 = vunpack.c.l.b16 %v380
    %v465 = vunpack.c.h.b16 %v380
    %v466 = vunpack.c.l.b16 %v381
    %v467 = vunpack.c.h.b16 %v381
    %v468 = vunpack.c.l.b16 %v382
    %v469 = vunpack.c.h.b16 %v382
    %v470 = vunpack.c.l.b16 %v383
    %v471 = vunpack.c.h.b16 %v383
    %v472 = vunpack.c.l.b16 %v384
    %v473 = vunpack.c.h.b16 %v384
    %v474 = vunpack.c.l.b16 %v385
    %v475 = vunpack.c.h.b16 %v385
    %v476 = vunpack.c.l.b16 %v386
    %v477 = vunpack.c.h.b16 %v386
    %v478 = vunpack.c.l.b16 %v387
    %v479 = vunpack.c.h.b16 %v387
    %v480 = vunpack.c.l.b16 %v388
    %v481 = vunpack.c.h.b16 %v388
    %v482 = vunpack.c.l.b16 %v389
    %v483 = vunpack.c.h.b16 %v389
    %v484 = vunpack.c.l.b16 %v390
    %v485 = vunpack.c.h.b16 %v390
    %v486 = vunpack.c.l.b16 %v391
    %v487 = vunpack.c.h.b16 %v391
    %v488 = vunpack.c.l.b16 %v392
    %v489 = vunpack.c.h.b16 %v392
    %v490 = vunpack.c.l.b16 %v393
    %v491 = vunpack.c.h.b16 %v393
    %v492 = vunpack.c.l.b16 %v394
    %v493 = vunpack.c.h.b16 %v394
    %v494 = vunpack.c.l.b16 %v395
    %v495 = vunpack.c.h.b16 %v395
    %v496 = vunpack.c.l.b16 %v396
    %v497 = vunpack.c.h.b16 %v396
    %v498 = vunpack.c.l.b16 %v397
    %v499 = vunpack.c.h.b16 %v397
    %v500 = vunpack.c.l.b16 %v398
    %v501 = vunpack.c.h.b16 %v398
    %v502 = vpack.c.b16 %v440, %v438
    %v503 = vpack.c.b16 %v441, %v439
    %v504 = vpack.c.b16 %v444, %v442
    %v505 = vpack.c.b16 %v445, %v443
    %v506 = vpack.c.b16 %v448, %v446
    %v507 = vpack.c.b16 %v449, %v447
    %v508 = vpack.c.b16 %v452, %v450
    %v509 = vpack.c.b16 %v453, %v451
    %v510 = vpack.c.b16 %v456, %v454
    %v511 = vpack.c.b16 %v457, %v455
    %v512 = vpack.c.b16 %v460, %v458
    %v513 = vpack.c.b16 %v461, %v459
    %v514 = vpack.c.b16 %v464, %v462
    %v515 = vpack.c.b16 %v465, %v463
    %v516 = vpack.c.b16 %v468, %v466
    %v517 = vpack.c.b16 %v469, %v467
    %v518 = vpack.c.b16 %v472, %v470
    %v519 = vpack.c.b16 %v473, %v471
    %v520 = vpack.c.b16 %v476, %v474
    %v521 = vpack.c.b16 %v477, %v475
    %v522 = vpack.c.b16 %v480, %v478
    %v523 = vpack.c.b16 %v481, %v479
    %v524 = vpack.c.b16 %v484, %v482
    %v525 = vpack.c.b16 %v485, %v483
    %v526 = vpack.c.b16 %v488, %v486
    %v527 = vpack.c.b16 %v489, %v487
    %v528 = vpack.c.b16 %v492, %v490
    %v529 = vpack.c.b16 %v493, %v491
    %v530 = vpack.c.b16 %v496, %v494
    %v531 = vpack.c.b16 %v497, %v495
    %v532 = vpack.c.b16 %v500, %v498
    %v533 = vpack.c.b16 %v501, %v499
    %566 = vmatpush.bf16.msra.mxu0 %v516
    %567 = vmatpush.bf16.msra.mxu0 %v514
    %568 = vmatpush.bf16.msra.mxu0 %v512
    %569 = vmatpush.bf16.msra.mxu0 %v510
    %570 = vmatpush.bf16.msra.mxu0 %v508
    %571 = vmatpush.bf16.msra.mxu0 %v506
    %572 = vmatpush.bf16.msra.mxu0 %v504
    %573 = vmatpush.bf16.msra.mxu0 %v502
    %574 = vmatmul.bf16.gmra.mxu0 %v402
    %v575 = vpop.f32.mrf.mxu0
    %v576 = vadd.f32 0.0, %v575
    %v577 = vpop.f32.mrf.mxu0
    %578 = vdwg.mxu0
    %579 = vmatpush.bf16.msra.mxu0 %v532
    %580 = vmatpush.bf16.msra.mxu0 %v530
    %581 = vmatpush.bf16.msra.mxu0 %v528
    %582 = vmatpush.bf16.msra.mxu0 %v526
    %583 = vmatpush.bf16.msra.mxu0 %v524
    %584 = vmatpush.bf16.msra.mxu0 %v522
    %585 = vmatpush.bf16.msra.mxu0 %v520
    %586 = vmatpush.bf16.msra.mxu0 %v518
    %587 = vmatmul.bf16.gmra.mxu0 %v403
    %v588 = vpop.f32.mrf.mxu0
    %v589 = vadd.f32 %v576, %v588
    %v590 = vpop.f32.mrf.mxu0
    %591 = vdwg.mxu0
    %592 = vmatpush.bf16.msra.mxu0 %v517
    %593 = vmatpush.bf16.msra.mxu0 %v515
    %594 = vmatpush.bf16.msra.mxu0 %v513
    %595 = vmatpush.bf16.msra.mxu0 %v511
    %596 = vmatpush.bf16.msra.mxu0 %v509
    %597 = vmatpush.bf16.msra.mxu0 %v507
    %598 = vmatpush.bf16.msra.mxu0 %v505
    %599 = vmatpush.bf16.msra.mxu0 %v503
    %600 = vmatmul.bf16.gmra.mxu0 %v402
    %v601 = vpop.f32.mrf.mxu0
    %v602 = vadd.f32 0.0, %v601
    %v603 = vpop.f32.mrf.mxu0
    %604 = vdwg.mxu0
    %605 = vmatpush.bf16.msra.mxu0 %v533
    %606 = vmatpush.bf16.msra.mxu0 %v531
    %607 = vmatpush.bf16.msra.mxu0 %v529
    %608 = vmatpush.bf16.msra.mxu0 %v527
    %609 = vmatpush.bf16.msra.mxu0 %v525
    %610 = vmatpush.bf16.msra.mxu0 %v523
    %611 = vmatpush.bf16.msra.mxu0 %v521
    %612 = vmatpush.bf16.msra.mxu0 %v519
    %613 = vmatmul.bf16.gmra.mxu0 %v403
    %v614 = vpop.f32.mrf.mxu0
    %v615 = vadd.f32 %v602, %v614
    %v616 = vpop.f32.mrf.mxu0
    %617 = vdwg.mxu0
    %618 = vst [vmem:[#allocation2] sm:$0xff] %v589
    %619 = vst [vmem:[#allocation2 + $0x8] sm:$0xff] %v615
    %v620 = vld [vmem:[#allocation2] sm:$0xff]
    %v621 = vld [vmem:[#allocation2 + $0x8] sm:$0xff]
    %s622 = scalar_lea.vmem [#allocation5], 256
    %v623 = vld [vmem:[%s622] sm:$0xff]
    %v624 = vld [vmem:[%s622 + $0x8] sm:$0xff]
    %v625 = vld [vmem:[%s622 + $0x10] sm:$0xff]
    %v626 = vld [vmem:[%s622 + $0x18] sm:$0xff]
    %v627 = vld [vmem:[%s622 + $0x20] sm:$0xff]
    %v628 = vld [vmem:[%s622 + $0x28] sm:$0xff]
    %v629 = vld [vmem:[%s622 + $0x30] sm:$0xff]
    %v630 = vld [vmem:[%s622 + $0x38] sm:$0xff]
    %v631 = vld [vmem:[%s622 + $0x40] sm:$0xff]
    %v632 = vld [vmem:[%s622 + $0x48] sm:$0xff]
    %v633 = vld [vmem:[%s622 + $0x50] sm:$0xff]
    %v634 = vld [vmem:[%s622 + $0x58] sm:$0xff]
    %v635 = vld [vmem:[%s622 + $0x60] sm:$0xff]
    %v636 = vld [vmem:[%s622 + $0x68] sm:$0xff]
    %v637 = vld [vmem:[%s622 + $0x70] sm:$0xff]
    %v638 = vld [vmem:[%s622 + $0x78] sm:$0xff]
    %v639 = vld [vmem:[%s622 + $0x80] sm:$0xff]
    %v640 = vld [vmem:[%s622 + $0x88] sm:$0xff]
    %v641 = vld [vmem:[%s622 + $0x90] sm:$0xff]
    %v642 = vld [vmem:[%s622 + $0x98] sm:$0xff]
    %v643 = vld [vmem:[%s622 + $0xa0] sm:$0xff]
    %v644 = vld [vmem:[%s622 + $0xa8] sm:$0xff]
    %v645 = vld [vmem:[%s622 + $0xb0] sm:$0xff]
    %v646 = vld [vmem:[%s622 + $0xb8] sm:$0xff]
    %v647 = vld [vmem:[%s622 + $0xc0] sm:$0xff]
    %v648 = vld [vmem:[%s622 + $0xc8] sm:$0xff]
    %v649 = vld [vmem:[%s622 + $0xd0] sm:$0xff]
    %v650 = vld [vmem:[%s622 + $0xd8] sm:$0xff]
    %v651 = vld [vmem:[%s622 + $0xe0] sm:$0xff]
    %v652 = vld [vmem:[%s622 + $0xe8] sm:$0xff]
    %v653 = vld [vmem:[%s622 + $0xf0] sm:$0xff]
    %v654 = vld [vmem:[%s622 + $0xf8] sm:$0xff]
    %v656 = vunpack.c.l.b16 %v360
    %v657 = vunpack.c.h.b16 %v360
    %v658 = vpack.c.b16 %v656, %v656
    %v659 = vpack.c.b16 %v657, %v657
    %v694 = vunpack.c.l.b16 %v623
    %v695 = vunpack.c.h.b16 %v623
    %v696 = vunpack.c.l.b16 %v624
    %v697 = vunpack.c.h.b16 %v624
    %v698 = vunpack.c.l.b16 %v625
    %v699 = vunpack.c.h.b16 %v625
    %v700 = vunpack.c.l.b16 %v626
    %v701 = vunpack.c.h.b16 %v626
    %v702 = vunpack.c.l.b16 %v627
    %v703 = vunpack.c.h.b16 %v627
    %v704 = vunpack.c.l.b16 %v628
    %v705 = vunpack.c.h.b16 %v628
    %v706 = vunpack.c.l.b16 %v629
    %v707 = vunpack.c.h.b16 %v629
    %v708 = vunpack.c.l.b16 %v630
    %v709 = vunpack.c.h.b16 %v630
    %v710 = vunpack.c.l.b16 %v631
    %v711 = vunpack.c.h.b16 %v631
    %v712 = vunpack.c.l.b16 %v632
    %v713 = vunpack.c.h.b16 %v632
    %v714 = vunpack.c.l.b16 %v633
    %v715 = vunpack.c.h.b16 %v633
    %v716 = vunpack.c.l.b16 %v634
    %v717 = vunpack.c.h.b16 %v634
    %v718 = vunpack.c.l.b16 %v635
    %v719 = vunpack.c.h.b16 %v635
    %v720 = vunpack.c.l.b16 %v636
    %v721 = vunpack.c.h.b16 %v636
    %v722 = vunpack.c.l.b16 %v637
    %v723 = vunpack.c.h.b16 %v637
    %v724 = vunpack.c.l.b16 %v638
    %v725 = vunpack.c.h.b16 %v638
    %v726 = vunpack.c.l.b16 %v639
    %v727 = vunpack.c.h.b16 %v639
    %v728 = vunpack.c.l.b16 %v640
    %v729 = vunpack.c.h.b16 %v640
    %v730 = vunpack.c.l.b16 %v641
    %v731 = vunpack.c.h.b16 %v641
    %v732 = vunpack.c.l.b16 %v642
    %v733 = vunpack.c.h.b16 %v642
    %v734 = vunpack.c.l.b16 %v643
    %v735 = vunpack.c.h.b16 %v643
    %v736 = vunpack.c.l.b16 %v644
    %v737 = vunpack.c.h.b16 %v644
    %v738 = vunpack.c.l.b16 %v645
    %v739 = vunpack.c.h.b16 %v645
    %v740 = vunpack.c.l.b16 %v646
    %v741 = vunpack.c.h.b16 %v646
    %v742 = vunpack.c.l.b16 %v647
    %v743 = vunpack.c.h.b16 %v647
    %v744 = vunpack.c.l.b16 %v648
    %v745 = vunpack.c.h.b16 %v648
    %v746 = vunpack.c.l.b16 %v649
    %v747 = vunpack.c.h.b16 %v649
    %v748 = vunpack.c.l.b16 %v650
    %v749 = vunpack.c.h.b16 %v650
    %v750 = vunpack.c.l.b16 %v651
    %v751 = vunpack.c.h.b16 %v651
    %v752 = vunpack.c.l.b16 %v652
    %v753 = vunpack.c.h.b16 %v652
    %v754 = vunpack.c.l.b16 %v653
    %v755 = vunpack.c.h.b16 %v653
    %v756 = vunpack.c.l.b16 %v654
    %v757 = vunpack.c.h.b16 %v654
    %v758 = vpack.c.b16 %v696, %v694
    %v759 = vpack.c.b16 %v697, %v695
    %v760 = vpack.c.b16 %v700, %v698
    %v761 = vpack.c.b16 %v701, %v699
    %v762 = vpack.c.b16 %v704, %v702
    %v763 = vpack.c.b16 %v705, %v703
    %v764 = vpack.c.b16 %v708, %v706
    %v765 = vpack.c.b16 %v709, %v707
    %v766 = vpack.c.b16 %v712, %v710
    %v767 = vpack.c.b16 %v713, %v711
    %v768 = vpack.c.b16 %v716, %v714
    %v769 = vpack.c.b16 %v717, %v715
    %v770 = vpack.c.b16 %v720, %v718
    %v771 = vpack.c.b16 %v721, %v719
    %v772 = vpack.c.b16 %v724, %v722
    %v773 = vpack.c.b16 %v725, %v723
    %v774 = vpack.c.b16 %v728, %v726
    %v775 = vpack.c.b16 %v729, %v727
    %v776 = vpack.c.b16 %v732, %v730
    %v777 = vpack.c.b16 %v733, %v731
    %v778 = vpack.c.b16 %v736, %v734
    %v779 = vpack.c.b16 %v737, %v735
    %v780 = vpack.c.b16 %v740, %v738
    %v781 = vpack.c.b16 %v741, %v739
    %v782 = vpack.c.b16 %v744, %v742
    %v783 = vpack.c.b16 %v745, %v743
    %v784 = vpack.c.b16 %v748, %v746
    %v785 = vpack.c.b16 %v749, %v747
    %v786 = vpack.c.b16 %v752, %v750
    %v787 = vpack.c.b16 %v753, %v751
    %v788 = vpack.c.b16 %v756, %v754
    %v789 = vpack.c.b16 %v757, %v755
    %822 = vmatpush.bf16.msra.mxu0 %v772
    %823 = vmatpush.bf16.msra.mxu0 %v770
    %824 = vmatpush.bf16.msra.mxu0 %v768
    %825 = vmatpush.bf16.msra.mxu0 %v766
    %826 = vmatpush.bf16.msra.mxu0 %v764
    %827 = vmatpush.bf16.msra.mxu0 %v762
    %828 = vmatpush.bf16.msra.mxu0 %v760
    %829 = vmatpush.bf16.msra.mxu0 %v758
    %830 = vmatmul.bf16.gmra.mxu0 %v658
    %v831 = vpop.f32.mrf.mxu0
    %v832 = vadd.f32 0.0, %v831
    %v833 = vpop.f32.mrf.mxu0
    %834 = vdwg.mxu0
    %835 = vmatpush.bf16.msra.mxu0 %v788
    %836 = vmatpush.bf16.msra.mxu0 %v786
    %837 = vmatpush.bf16.msra.mxu0 %v784
    %838 = vmatpush.bf16.msra.mxu0 %v782
    %839 = vmatpush.bf16.msra.mxu0 %v780
    %840 = vmatpush.bf16.msra.mxu0 %v778
    %841 = vmatpush.bf16.msra.mxu0 %v776
    %842 = vmatpush.bf16.msra.mxu0 %v774
    %843 = vmatmul.bf16.gmra.mxu0 %v659
    %v844 = vpop.f32.mrf.mxu0
    %v845 = vadd.f32 %v832, %v844
    %v846 = vpop.f32.mrf.mxu0
    %847 = vdwg.mxu0
    %848 = vmatpush.bf16.msra.mxu0 %v773
    %849 = vmatpush.bf16.msra.mxu0 %v771
    %850 = vmatpush.bf16.msra.mxu0 %v769
    %851 = vmatpush.bf16.msra.mxu0 %v767
    %852 = vmatpush.bf16.msra.mxu0 %v765
    %853 = vmatpush.bf16.msra.mxu0 %v763
    %854 = vmatpush.bf16.msra.mxu0 %v761
    %855 = vmatpush.bf16.msra.mxu0 %v759
    %856 = vmatmul.bf16.gmra.mxu0 %v658
    %v857 = vpop.f32.mrf.mxu0
    %v858 = vadd.f32 0.0, %v857
    %v859 = vpop.f32.mrf.mxu0
    %860 = vdwg.mxu0
    %861 = vmatpush.bf16.msra.mxu0 %v789
    %862 = vmatpush.bf16.msra.mxu0 %v787
    %863 = vmatpush.bf16.msra.mxu0 %v785
    %864 = vmatpush.bf16.msra.mxu0 %v783
    %865 = vmatpush.bf16.msra.mxu0 %v781
    %866 = vmatpush.bf16.msra.mxu0 %v779
    %867 = vmatpush.bf16.msra.mxu0 %v777
    %868 = vmatpush.bf16.msra.mxu0 %v775
    %869 = vmatmul.bf16.gmra.mxu0 %v659
    %v870 = vpop.f32.mrf.mxu0
    %v871 = vadd.f32 %v858, %v870
    %v872 = vpop.f32.mrf.mxu0
    %873 = vdwg.mxu0
    %v874 = vadd.f32 %v620, %v845
    %v875 = vadd.f32 %v621, %v871
    %876 = vst [vmem:[#allocation2] sm:$0xff] %v874
    %877 = vst [vmem:[#allocation2 + $0x8] sm:$0xff] %v875
    %v878 = vld [vmem:[#allocation2] sm:$0xff]
    %v879 = vld [vmem:[#allocation2 + $0x8] sm:$0xff]
    %s880 = scalar_lea.vmem [#allocation5], 512
    %v881 = vld [vmem:[%s880] sm:$0xff]
    %v882 = vld [vmem:[%s880 + $0x8] sm:$0xff]
    %v883 = vld [vmem:[%s880 + $0x10] sm:$0xff]
    %v884 = vld [vmem:[%s880 + $0x18] sm:$0xff]
    %v885 = vld [vmem:[%s880 + $0x20] sm:$0xff]
    %v886 = vld [vmem:[%s880 + $0x28] sm:$0xff]
    %v887 = vld [vmem:[%s880 + $0x30] sm:$0xff]
    %v888 = vld [vmem:[%s880 + $0x38] sm:$0xff]
    %v889 = vld [vmem:[%s880 + $0x40] sm:$0xff]
    %v890 = vld [vmem:[%s880 + $0x48] sm:$0xff]
    %v891 = vld [vmem:[%s880 + $0x50] sm:$0xff]
    %v892 = vld [vmem:[%s880 + $0x58] sm:$0xff]
    %v893 = vld [vmem:[%s880 + $0x60] sm:$0xff]
    %v894 = vld [vmem:[%s880 + $0x68] sm:$0xff]
    %v895 = vld [vmem:[%s880 + $0x70] sm:$0xff]
    %v896 = vld [vmem:[%s880 + $0x78] sm:$0xff]
    %v897 = vld [vmem:[%s880 + $0x80] sm:$0xff]
    %v898 = vld [vmem:[%s880 + $0x88] sm:$0xff]
    %v899 = vld [vmem:[%s880 + $0x90] sm:$0xff]
    %v900 = vld [vmem:[%s880 + $0x98] sm:$0xff]
    %v901 = vld [vmem:[%s880 + $0xa0] sm:$0xff]
    %v902 = vld [vmem:[%s880 + $0xa8] sm:$0xff]
    %v903 = vld [vmem:[%s880 + $0xb0] sm:$0xff]
    %v904 = vld [vmem:[%s880 + $0xb8] sm:$0xff]
    %v905 = vld [vmem:[%s880 + $0xc0] sm:$0xff]
    %v906 = vld [vmem:[%s880 + $0xc8] sm:$0xff]
    %v907 = vld [vmem:[%s880 + $0xd0] sm:$0xff]
    %v908 = vld [vmem:[%s880 + $0xd8] sm:$0xff]
    %v909 = vld [vmem:[%s880 + $0xe0] sm:$0xff]
    %v910 = vld [vmem:[%s880 + $0xe8] sm:$0xff]
    %v911 = vld [vmem:[%s880 + $0xf0] sm:$0xff]
    %v912 = vld [vmem:[%s880 + $0xf8] sm:$0xff]
    %v914 = vunpack.c.l.b16 %v361
    %v915 = vunpack.c.h.b16 %v361
    %v916 = vpack.c.b16 %v914, %v914
    %v917 = vpack.c.b16 %v915, %v915
    %v952 = vunpack.c.l.b16 %v881
    %v953 = vunpack.c.h.b16 %v881
    %v954 = vunpack.c.l.b16 %v882
    %v955 = vunpack.c.h.b16 %v882
    %v956 = vunpack.c.l.b16 %v883
    %v957 = vunpack.c.h.b16 %v883
    %v958 = vunpack.c.l.b16 %v884
    %v959 = vunpack.c.h.b16 %v884
    %v960 = vunpack.c.l.b16 %v885
    %v961 = vunpack.c.h.b16 %v885
    %v962 = vunpack.c.l.b16 %v886
    %v963 = vunpack.c.h.b16 %v886
    %v964 = vunpack.c.l.b16 %v887
    %v965 = vunpack.c.h.b16 %v887
    %v966 = vunpack.c.l.b16 %v888
    %v967 = vunpack.c.h.b16 %v888
    %v968 = vunpack.c.l.b16 %v889
    %v969 = vunpack.c.h.b16 %v889
    %v970 = vunpack.c.l.b16 %v890
    %v971 = vunpack.c.h.b16 %v890
    %v972 = vunpack.c.l.b16 %v891
    %v973 = vunpack.c.h.b16 %v891
    %v974 = vunpack.c.l.b16 %v892
    %v975 = vunpack.c.h.b16 %v892
    %v976 = vunpack.c.l.b16 %v893
    %v977 = vunpack.c.h.b16 %v893
    %v978 = vunpack.c.l.b16 %v894
    %v979 = vunpack.c.h.b16 %v894
    %v980 = vunpack.c.l.b16 %v895
    %v981 = vunpack.c.h.b16 %v895
    %v982 = vunpack.c.l.b16 %v896
    %v983 = vunpack.c.h.b16 %v896
    %v984 = vunpack.c.l.b16 %v897
    %v985 = vunpack.c.h.b16 %v897
    %v986 = vunpack.c.l.b16 %v898
    %v987 = vunpack.c.h.b16 %v898
    %v988 = vunpack.c.l.b16 %v899
    %v989 = vunpack.c.h.b16 %v899
    %v990 = vunpack.c.l.b16 %v900
    %v991 = vunpack.c.h.b16 %v900
    %v992 = vunpack.c.l.b16 %v901
    %v993 = vunpack.c.h.b16 %v901
    %v994 = vunpack.c.l.b16 %v902
    %v995 = vunpack.c.h.b16 %v902
    %v996 = vunpack.c.l.b16 %v903
    %v997 = vunpack.c.h.b16 %v903
    %v998 = vunpack.c.l.b16 %v904
    %v999 = vunpack.c.h.b16 %v904
    %v1000 = vunpack.c.l.b16 %v905
    %v1001 = vunpack.c.h.b16 %v905
    %v1002 = vunpack.c.l.b16 %v906
    %v1003 = vunpack.c.h.b16 %v906
    %v1004 = vunpack.c.l.b16 %v907
    %v1005 = vunpack.c.h.b16 %v907
    %v1006 = vunpack.c.l.b16 %v908
    %v1007 = vunpack.c.h.b16 %v908
    %v1008 = vunpack.c.l.b16 %v909
    %v1009 = vunpack.c.h.b16 %v909
    %v1010 = vunpack.c.l.b16 %v910
    %v1011 = vunpack.c.h.b16 %v910
    %v1012 = vunpack.c.l.b16 %v911
    %v1013 = vunpack.c.h.b16 %v911
    %v1014 = vunpack.c.l.b16 %v912
    %v1015 = vunpack.c.h.b16 %v912
    %v1016 = vpack.c.b16 %v954, %v952
    %v1017 = vpack.c.b16 %v955, %v953
    %v1018 = vpack.c.b16 %v958, %v956
    %v1019 = vpack.c.b16 %v959, %v957
    %v1020 = vpack.c.b16 %v962, %v960
    %v1021 = vpack.c.b16 %v963, %v961
    %v1022 = vpack.c.b16 %v966, %v964
    %v1023 = vpack.c.b16 %v967, %v965
    %v1024 = vpack.c.b16 %v970, %v968
    %v1025 = vpack.c.b16 %v971, %v969
    %v1026 = vpack.c.b16 %v974, %v972
    %v1027 = vpack.c.b16 %v975, %v973
    %v1028 = vpack.c.b16 %v978, %v976
    %v1029 = vpack.c.b16 %v979, %v977
    %v1030 = vpack.c.b16 %v982, %v980
    %v1031 = vpack.c.b16 %v983, %v981
    %v1032 = vpack.c.b16 %v986, %v984
    %v1033 = vpack.c.b16 %v987, %v985
    %v1034 = vpack.c.b16 %v990, %v988
    %v1035 = vpack.c.b16 %v991, %v989
    %v1036 = vpack.c.b16 %v994, %v992
    %v1037 = vpack.c.b16 %v995, %v993
    %v1038 = vpack.c.b16 %v998, %v996
    %v1039 = vpack.c.b16 %v999, %v997
    %v1040 = vpack.c.b16 %v1002, %v1000
    %v1041 = vpack.c.b16 %v1003, %v1001
    %v1042 = vpack.c.b16 %v1006, %v1004
    %v1043 = vpack.c.b16 %v1007, %v1005
    %v1044 = vpack.c.b16 %v1010, %v1008
    %v1045 = vpack.c.b16 %v1011, %v1009
    %v1046 = vpack.c.b16 %v1014, %v1012
    %v1047 = vpack.c.b16 %v1015, %v1013
    %1080 = vmatpush.bf16.msra.mxu0 %v1030
    %1081 = vmatpush.bf16.msra.mxu0 %v1028
    %1082 = vmatpush.bf16.msra.mxu0 %v1026
    %1083 = vmatpush.bf16.msra.mxu0 %v1024
    %1084 = vmatpush.bf16.msra.mxu0 %v1022
    %1085 = vmatpush.bf16.msra.mxu0 %v1020
    %1086 = vmatpush.bf16.msra.mxu0 %v1018
    %1087 = vmatpush.bf16.msra.mxu0 %v1016
    %1088 = vmatmul.bf16.gmra.mxu0 %v916
    %v1089 = vpop.f32.mrf.mxu0
    %v1090 = vadd.f32 0.0, %v1089
    %v1091 = vpop.f32.mrf.mxu0
    %1092 = vdwg.mxu0
    %1093 = vmatpush.bf16.msra.mxu0 %v1046
    %1094 = vmatpush.bf16.msra.mxu0 %v1044
    %1095 = vmatpush.bf16.msra.mxu0 %v1042
    %1096 = vmatpush.bf16.msra.mxu0 %v1040
    %1097 = vmatpush.bf16.msra.mxu0 %v1038
    %1098 = vmatpush.bf16.msra.mxu0 %v1036
    %1099 = vmatpush.bf16.msra.mxu0 %v1034
    %1100 = vmatpush.bf16.msra.mxu0 %v1032
    %1101 = vmatmul.bf16.gmra.mxu0 %v917
    %v1102 = vpop.f32.mrf.mxu0
    %v1103 = vadd.f32 %v1090, %v1102
    %v1104 = vpop.f32.mrf.mxu0
    %1105 = vdwg.mxu0
    %1106 = vmatpush.bf16.msra.mxu0 %v1031
    %1107 = vmatpush.bf16.msra.mxu0 %v1029
    %1108 = vmatpush.bf16.msra.mxu0 %v1027
    %1109 = vmatpush.bf16.msra.mxu0 %v1025
    %1110 = vmatpush.bf16.msra.mxu0 %v1023
    %1111 = vmatpush.bf16.msra.mxu0 %v1021
    %1112 = vmatpush.bf16.msra.mxu0 %v1019
    %1113 = vmatpush.bf16.msra.mxu0 %v1017
    %1114 = vmatmul.bf16.gmra.mxu0 %v916
    %v1115 = vpop.f32.mrf.mxu0
    %v1116 = vadd.f32 0.0, %v1115
    %v1117 = vpop.f32.mrf.mxu0
    %1118 = vdwg.mxu0
    %1119 = vmatpush.bf16.msra.mxu0 %v1047
    %1120 = vmatpush.bf16.msra.mxu0 %v1045
    %1121 = vmatpush.bf16.msra.mxu0 %v1043
    %1122 = vmatpush.bf16.msra.mxu0 %v1041
    %1123 = vmatpush.bf16.msra.mxu0 %v1039
    %1124 = vmatpush.bf16.msra.mxu0 %v1037
    %1125 = vmatpush.bf16.msra.mxu0 %v1035
    %1126 = vmatpush.bf16.msra.mxu0 %v1033
    %1127 = vmatmul.bf16.gmra.mxu0 %v917
    %v1128 = vpop.f32.mrf.mxu0
    %v1129 = vadd.f32 %v1116, %v1128
    %v1130 = vpop.f32.mrf.mxu0
    %1131 = vdwg.mxu0
    %v1132 = vadd.f32 %v878, %v1103
    %v1133 = vadd.f32 %v879, %v1129
    %1134 = vst [vmem:[#allocation2] sm:$0xff] %v1132
    %1135 = vst [vmem:[#allocation2 + $0x8] sm:$0xff] %v1133
    %v1136 = vld [vmem:[#allocation2] sm:$0xff]
    %v1137 = vld [vmem:[#allocation2 + $0x8] sm:$0xff]
    %s1138 = scalar_lea.vmem [#allocation5], 768
    %v1139 = vld [vmem:[%s1138] sm:$0xff]
    %v1140 = vld [vmem:[%s1138 + $0x8] sm:$0xff]
    %v1141 = vld [vmem:[%s1138 + $0x10] sm:$0xff]
    %v1142 = vld [vmem:[%s1138 + $0x18] sm:$0xff]
    %v1143 = vld [vmem:[%s1138 + $0x20] sm:$0xff]
    %v1144 = vld [vmem:[%s1138 + $0x28] sm:$0xff]
    %v1145 = vld [vmem:[%s1138 + $0x30] sm:$0xff]
    %v1146 = vld [vmem:[%s1138 + $0x38] sm:$0xff]
    %v1147 = vld [vmem:[%s1138 + $0x40] sm:$0xff]
    %v1148 = vld [vmem:[%s1138 + $0x48] sm:$0xff]
    %v1149 = vld [vmem:[%s1138 + $0x50] sm:$0xff]
    %v1150 = vld [vmem:[%s1138 + $0x58] sm:$0xff]
    %v1151 = vld [vmem:[%s1138 + $0x60] sm:$0xff]
    %v1152 = vld [vmem:[%s1138 + $0x68] sm:$0xff]
    %v1153 = vld [vmem:[%s1138 + $0x70] sm:$0xff]
    %v1154 = vld [vmem:[%s1138 + $0x78] sm:$0xff]
    %v1155 = vld [vmem:[%s1138 + $0x80] sm:$0xff]
    %v1156 = vld [vmem:[%s1138 + $0x88] sm:$0xff]
    %v1157 = vld [vmem:[%s1138 + $0x90] sm:$0xff]
    %v1158 = vld [vmem:[%s1138 + $0x98] sm:$0xff]
    %v1159 = vld [vmem:[%s1138 + $0xa0] sm:$0xff]
    %v1160 = vld [vmem:[%s1138 + $0xa8] sm:$0xff]
    %v1161 = vld [vmem:[%s1138 + $0xb0] sm:$0xff]
    %v1162 = vld [vmem:[%s1138 + $0xb8] sm:$0xff]
    %v1163 = vld [vmem:[%s1138 + $0xc0] sm:$0xff]
    %v1164 = vld [vmem:[%s1138 + $0xc8] sm:$0xff]
    %v1165 = vld [vmem:[%s1138 + $0xd0] sm:$0xff]
    %v1166 = vld [vmem:[%s1138 + $0xd8] sm:$0xff]
    %v1167 = vld [vmem:[%s1138 + $0xe0] sm:$0xff]
    %v1168 = vld [vmem:[%s1138 + $0xe8] sm:$0xff]
    %v1169 = vld [vmem:[%s1138 + $0xf0] sm:$0xff]
    %v1170 = vld [vmem:[%s1138 + $0xf8] sm:$0xff]
    %v1172 = vunpack.c.l.b16 %v362
    %v1173 = vunpack.c.h.b16 %v362
    %v1174 = vpack.c.b16 %v1172, %v1172
    %v1175 = vpack.c.b16 %v1173, %v1173
    %v1210 = vunpack.c.l.b16 %v1139
    %v1211 = vunpack.c.h.b16 %v1139
    %v1212 = vunpack.c.l.b16 %v1140
    %v1213 = vunpack.c.h.b16 %v1140
    %v1214 = vunpack.c.l.b16 %v1141
    %v1215 = vunpack.c.h.b16 %v1141
    %v1216 = vunpack.c.l.b16 %v1142
    %v1217 = vunpack.c.h.b16 %v1142
    %v1218 = vunpack.c.l.b16 %v1143
    %v1219 = vunpack.c.h.b16 %v1143
    %v1220 = vunpack.c.l.b16 %v1144
    %v1221 = vunpack.c.h.b16 %v1144
    %v1222 = vunpack.c.l.b16 %v1145
    %v1223 = vunpack.c.h.b16 %v1145
    %v1224 = vunpack.c.l.b16 %v1146
    %v1225 = vunpack.c.h.b16 %v1146
    %v1226 = vunpack.c.l.b16 %v1147
    %v1227 = vunpack.c.h.b16 %v1147
    %v1228 = vunpack.c.l.b16 %v1148
    %v1229 = vunpack.c.h.b16 %v1148
    %v1230 = vunpack.c.l.b16 %v1149
    %v1231 = vunpack.c.h.b16 %v1149
    %v1232 = vunpack.c.l.b16 %v1150
    %v1233 = vunpack.c.h.b16 %v1150
    %v1234 = vunpack.c.l.b16 %v1151
    %v1235 = vunpack.c.h.b16 %v1151
    %v1236 = vunpack.c.l.b16 %v1152
    %v1237 = vunpack.c.h.b16 %v1152
    %v1238 = vunpack.c.l.b16 %v1153
    %v1239 = vunpack.c.h.b16 %v1153
    %v1240 = vunpack.c.l.b16 %v1154
    %v1241 = vunpack.c.h.b16 %v1154
    %v1242 = vunpack.c.l.b16 %v1155
    %v1243 = vunpack.c.h.b16 %v1155
    %v1244 = vunpack.c.l.b16 %v1156
    %v1245 = vunpack.c.h.b16 %v1156
    %v1246 = vunpack.c.l.b16 %v1157
    %v1247 = vunpack.c.h.b16 %v1157
    %v1248 = vunpack.c.l.b16 %v1158
    %v1249 = vunpack.c.h.b16 %v1158
    %v1250 = vunpack.c.l.b16 %v1159
    %v1251 = vunpack.c.h.b16 %v1159
    %v1252 = vunpack.c.l.b16 %v1160
    %v1253 = vunpack.c.h.b16 %v1160
    %v1254 = vunpack.c.l.b16 %v1161
    %v1255 = vunpack.c.h.b16 %v1161
    %v1256 = vunpack.c.l.b16 %v1162
    %v1257 = vunpack.c.h.b16 %v1162
    %v1258 = vunpack.c.l.b16 %v1163
    %v1259 = vunpack.c.h.b16 %v1163
    %v1260 = vunpack.c.l.b16 %v1164
    %v1261 = vunpack.c.h.b16 %v1164
    %v1262 = vunpack.c.l.b16 %v1165
    %v1263 = vunpack.c.h.b16 %v1165
    %v1264 = vunpack.c.l.b16 %v1166
    %v1265 = vunpack.c.h.b16 %v1166
    %v1266 = vunpack.c.l.b16 %v1167
    %v1267 = vunpack.c.h.b16 %v1167
    %v1268 = vunpack.c.l.b16 %v1168
    %v1269 = vunpack.c.h.b16 %v1168
    %v1270 = vunpack.c.l.b16 %v1169
    %v1271 = vunpack.c.h.b16 %v1169
    %v1272 = vunpack.c.l.b16 %v1170
    %v1273 = vunpack.c.h.b16 %v1170
    %v1274 = vpack.c.b16 %v1212, %v1210
    %v1275 = vpack.c.b16 %v1213, %v1211
    %v1276 = vpack.c.b16 %v1216, %v1214
    %v1277 = vpack.c.b16 %v1217, %v1215
    %v1278 = vpack.c.b16 %v1220, %v1218
    %v1279 = vpack.c.b16 %v1221, %v1219
    %v1280 = vpack.c.b16 %v1224, %v1222
    %v1281 = vpack.c.b16 %v1225, %v1223
    %v1282 = vpack.c.b16 %v1228, %v1226
    %v1283 = vpack.c.b16 %v1229, %v1227
    %v1284 = vpack.c.b16 %v1232, %v1230
    %v1285 = vpack.c.b16 %v1233, %v1231
    %v1286 = vpack.c.b16 %v1236, %v1234
    %v1287 = vpack.c.b16 %v1237, %v1235
    %v1288 = vpack.c.b16 %v1240, %v1238
    %v1289 = vpack.c.b16 %v1241, %v1239
    %v1290 = vpack.c.b16 %v1244, %v1242
    %v1291 = vpack.c.b16 %v1245, %v1243
    %v1292 = vpack.c.b16 %v1248, %v1246
    %v1293 = vpack.c.b16 %v1249, %v1247
    %v1294 = vpack.c.b16 %v1252, %v1250
    %v1295 = vpack.c.b16 %v1253, %v1251
    %v1296 = vpack.c.b16 %v1256, %v1254
    %v1297 = vpack.c.b16 %v1257, %v1255
    %v1298 = vpack.c.b16 %v1260, %v1258
    %v1299 = vpack.c.b16 %v1261, %v1259
    %v1300 = vpack.c.b16 %v1264, %v1262
    %v1301 = vpack.c.b16 %v1265, %v1263
    %v1302 = vpack.c.b16 %v1268, %v1266
    %v1303 = vpack.c.b16 %v1269, %v1267
    %v1304 = vpack.c.b16 %v1272, %v1270
    %v1305 = vpack.c.b16 %v1273, %v1271
    %1338 = vmatpush.bf16.msra.mxu0 %v1288
    %1339 = vmatpush.bf16.msra.mxu0 %v1286
    %1340 = vmatpush.bf16.msra.mxu0 %v1284
    %1341 = vmatpush.bf16.msra.mxu0 %v1282
    %1342 = vmatpush.bf16.msra.mxu0 %v1280
    %1343 = vmatpush.bf16.msra.mxu0 %v1278
    %1344 = vmatpush.bf16.msra.mxu0 %v1276
    %1345 = vmatpush.bf16.msra.mxu0 %v1274
    %1346 = vmatmul.bf16.gmra.mxu0 %v1174
    %v1347 = vpop.f32.mrf.mxu0
    %v1348 = vadd.f32 0.0, %v1347
    %v1349 = vpop.f32.mrf.mxu0
    %1350 = vdwg.mxu0
    %1351 = vmatpush.bf16.msra.mxu0 %v1304
    %1352 = vmatpush.bf16.msra.mxu0 %v1302
    %1353 = vmatpush.bf16.msra.mxu0 %v1300
    %1354 = vmatpush.bf16.msra.mxu0 %v1298
    %1355 = vmatpush.bf16.msra.mxu0 %v1296
    %1356 = vmatpush.bf16.msra.mxu0 %v1294
    %1357 = vmatpush.bf16.msra.mxu0 %v1292
    %1358 = vmatpush.bf16.msra.mxu0 %v1290
    %1359 = vmatmul.bf16.gmra.mxu0 %v1175
    %v1360 = vpop.f32.mrf.mxu0
    %v1361 = vadd.f32 %v1348, %v1360
    %v1362 = vpop.f32.mrf.mxu0
    %1363 = vdwg.mxu0
    %1364 = vmatpush.bf16.msra.mxu0 %v1289
    %1365 = vmatpush.bf16.msra.mxu0 %v1287
    %1366 = vmatpush.bf16.msra.mxu0 %v1285
    %1367 = vmatpush.bf16.msra.mxu0 %v1283
    %1368 = vmatpush.bf16.msra.mxu0 %v1281
    %1369 = vmatpush.bf16.msra.mxu0 %v1279
    %1370 = vmatpush.bf16.msra.mxu0 %v1277
    %1371 = vmatpush.bf16.msra.mxu0 %v1275
    %1372 = vmatmul.bf16.gmra.mxu0 %v1174
    %v1373 = vpop.f32.mrf.mxu0
    %v1374 = vadd.f32 0.0, %v1373
    %v1375 = vpop.f32.mrf.mxu0
    %1376 = vdwg.mxu0
    %1377 = vmatpush.bf16.msra.mxu0 %v1305
    %1378 = vmatpush.bf16.msra.mxu0 %v1303
    %1379 = vmatpush.bf16.msra.mxu0 %v1301
    %1380 = vmatpush.bf16.msra.mxu0 %v1299
    %1381 = vmatpush.bf16.msra.mxu0 %v1297
    %1382 = vmatpush.bf16.msra.mxu0 %v1295
    %1383 = vmatpush.bf16.msra.mxu0 %v1293
    %1384 = vmatpush.bf16.msra.mxu0 %v1291
    %1385 = vmatmul.bf16.gmra.mxu0 %v1175
    %v1386 = vpop.f32.mrf.mxu0
    %v1387 = vadd.f32 %v1374, %v1386
    %v1388 = vpop.f32.mrf.mxu0
    %1389 = vdwg.mxu0
    %v1390 = vadd.f32 %v1136, %v1361
    %v1391 = vadd.f32 %v1137, %v1387
    %1392 = vst [vmem:[#allocation2] sm:$0xff] %v1390
    %1393 = vst [vmem:[#allocation2 + $0x8] sm:$0xff] %v1391
    %v1394 = vld [vmem:[#allocation2] sm:$0xff]
    %v1395 = vld [vmem:[#allocation2 + $0x8] sm:$0xff]
    %s1396 = scalar_lea.vmem [#allocation5], 1024
    %v1397 = vld [vmem:[%s1396] sm:$0xff]
    %v1398 = vld [vmem:[%s1396 + $0x8] sm:$0xff]
    %v1399 = vld [vmem:[%s1396 + $0x10] sm:$0xff]
    %v1400 = vld [vmem:[%s1396 + $0x18] sm:$0xff]
    %v1401 = vld [vmem:[%s1396 + $0x20] sm:$0xff]
    %v1402 = vld [vmem:[%s1396 + $0x28] sm:$0xff]
    %v1403 = vld [vmem:[%s1396 + $0x30] sm:$0xff]
    %v1404 = vld [vmem:[%s1396 + $0x38] sm:$0xff]
    %v1405 = vld [vmem:[%s1396 + $0x40] sm:$0xff]
    %v1406 = vld [vmem:[%s1396 + $0x48] sm:$0xff]
    %v1407 = vld [vmem:[%s1396 + $0x50] sm:$0xff]
    %v1408 = vld [vmem:[%s1396 + $0x58] sm:$0xff]
    %v1409 = vld [vmem:[%s1396 + $0x60] sm:$0xff]
    %v1410 = vld [vmem:[%s1396 + $0x68] sm:$0xff]
    %v1411 = vld [vmem:[%s1396 + $0x70] sm:$0xff]
    %v1412 = vld [vmem:[%s1396 + $0x78] sm:$0xff]
    %v1413 = vld [vmem:[%s1396 + $0x80] sm:$0xff]
    %v1414 = vld [vmem:[%s1396 + $0x88] sm:$0xff]
    %v1415 = vld [vmem:[%s1396 + $0x90] sm:$0xff]
    %v1416 = vld [vmem:[%s1396 + $0x98] sm:$0xff]
    %v1417 = vld [vmem:[%s1396 + $0xa0] sm:$0xff]
    %v1418 = vld [vmem:[%s1396 + $0xa8] sm:$0xff]
    %v1419 = vld [vmem:[%s1396 + $0xb0] sm:$0xff]
    %v1420 = vld [vmem:[%s1396 + $0xb8] sm:$0xff]
    %v1421 = vld [vmem:[%s1396 + $0xc0] sm:$0xff]
    %v1422 = vld [vmem:[%s1396 + $0xc8] sm:$0xff]
    %v1423 = vld [vmem:[%s1396 + $0xd0] sm:$0xff]
    %v1424 = vld [vmem:[%s1396 + $0xd8] sm:$0xff]
    %v1425 = vld [vmem:[%s1396 + $0xe0] sm:$0xff]
    %v1426 = vld [vmem:[%s1396 + $0xe8] sm:$0xff]
    %v1427 = vld [vmem:[%s1396 + $0xf0] sm:$0xff]
    %v1428 = vld [vmem:[%s1396 + $0xf8] sm:$0xff]
    %v1430 = vunpack.c.l.b16 %v363
    %v1431 = vunpack.c.h.b16 %v363
    %v1432 = vpack.c.b16 %v1430, %v1430
    %v1433 = vpack.c.b16 %v1431, %v1431
    %v1468 = vunpack.c.l.b16 %v1397
    %v1469 = vunpack.c.h.b16 %v1397
    %v1470 = vunpack.c.l.b16 %v1398
    %v1471 = vunpack.c.h.b16 %v1398
    %v1472 = vunpack.c.l.b16 %v1399
    %v1473 = vunpack.c.h.b16 %v1399
    %v1474 = vunpack.c.l.b16 %v1400
    %v1475 = vunpack.c.h.b16 %v1400
    %v1476 = vunpack.c.l.b16 %v1401
    %v1477 = vunpack.c.h.b16 %v1401
    %v1478 = vunpack.c.l.b16 %v1402
    %v1479 = vunpack.c.h.b16 %v1402
    %v1480 = vunpack.c.l.b16 %v1403
    %v1481 = vunpack.c.h.b16 %v1403
    %v1482 = vunpack.c.l.b16 %v1404
    %v1483 = vunpack.c.h.b16 %v1404
    %v1484 = vunpack.c.l.b16 %v1405
    %v1485 = vunpack.c.h.b16 %v1405
    %v1486 = vunpack.c.l.b16 %v1406
    %v1487 = vunpack.c.h.b16 %v1406
    %v1488 = vunpack.c.l.b16 %v1407
    %v1489 = vunpack.c.h.b16 %v1407
    %v1490 = vunpack.c.l.b16 %v1408
    %v1491 = vunpack.c.h.b16 %v1408
    %v1492 = vunpack.c.l.b16 %v1409
    %v1493 = vunpack.c.h.b16 %v1409
    %v1494 = vunpack.c.l.b16 %v1410
    %v1495 = vunpack.c.h.b16 %v1410
    %v1496 = vunpack.c.l.b16 %v1411
    %v1497 = vunpack.c.h.b16 %v1411
    %v1498 = vunpack.c.l.b16 %v1412
    %v1499 = vunpack.c.h.b16 %v1412
    %v1500 = vunpack.c.l.b16 %v1413
    %v1501 = vunpack.c.h.b16 %v1413
    %v1502 = vunpack.c.l.b16 %v1414
    %v1503 = vunpack.c.h.b16 %v1414
    %v1504 = vunpack.c.l.b16 %v1415
    %v1505 = vunpack.c.h.b16 %v1415
    %v1506 = vunpack.c.l.b16 %v1416
    %v1507 = vunpack.c.h.b16 %v1416
    %v1508 = vunpack.c.l.b16 %v1417
    %v1509 = vunpack.c.h.b16 %v1417
    %v1510 = vunpack.c.l.b16 %v1418
    %v1511 = vunpack.c.h.b16 %v1418
    %v1512 = vunpack.c.l.b16 %v1419
    %v1513 = vunpack.c.h.b16 %v1419
    %v1514 = vunpack.c.l.b16 %v1420
    %v1515 = vunpack.c.h.b16 %v1420
    %v1516 = vunpack.c.l.b16 %v1421
    %v1517 = vunpack.c.h.b16 %v1421
    %v1518 = vunpack.c.l.b16 %v1422
    %v1519 = vunpack.c.h.b16 %v1422
    %v1520 = vunpack.c.l.b16 %v1423
    %v1521 = vunpack.c.h.b16 %v1423
    %v1522 = vunpack.c.l.b16 %v1424
    %v1523 = vunpack.c.h.b16 %v1424
    %v1524 = vunpack.c.l.b16 %v1425
    %v1525 = vunpack.c.h.b16 %v1425
    %v1526 = vunpack.c.l.b16 %v1426
    %v1527 = vunpack.c.h.b16 %v1426
    %v1528 = vunpack.c.l.b16 %v1427
    %v1529 = vunpack.c.h.b16 %v1427
    %v1530 = vunpack.c.l.b16 %v1428
    %v1531 = vunpack.c.h.b16 %v1428
    %v1532 = vpack.c.b16 %v1470, %v1468
    %v1533 = vpack.c.b16 %v1471, %v1469
    %v1534 = vpack.c.b16 %v1474, %v1472
    %v1535 = vpack.c.b16 %v1475, %v1473
    %v1536 = vpack.c.b16 %v1478, %v1476
    %v1537 = vpack.c.b16 %v1479, %v1477
    %v1538 = vpack.c.b16 %v1482, %v1480
    %v1539 = vpack.c.b16 %v1483, %v1481
    %v1540 = vpack.c.b16 %v1486, %v1484
    %v1541 = vpack.c.b16 %v1487, %v1485
    %v1542 = vpack.c.b16 %v1490, %v1488
    %v1543 = vpack.c.b16 %v1491, %v1489
    %v1544 = vpack.c.b16 %v1494, %v1492
    %v1545 = vpack.c.b16 %v1495, %v1493
    %v1546 = vpack.c.b16 %v1498, %v1496
    %v1547 = vpack.c.b16 %v1499, %v1497
    %v1548 = vpack.c.b16 %v1502, %v1500
    %v1549 = vpack.c.b16 %v1503, %v1501
    %v1550 = vpack.c.b16 %v1506, %v1504
    %v1551 = vpack.c.b16 %v1507, %v1505
    %v1552 = vpack.c.b16 %v1510, %v1508
    %v1553 = vpack.c.b16 %v1511, %v1509
    %v1554 = vpack.c.b16 %v1514, %v1512
    %v1555 = vpack.c.b16 %v1515, %v1513
    %v1556 = vpack.c.b16 %v1518, %v1516
    %v1557 = vpack.c.b16 %v1519, %v1517
    %v1558 = vpack.c.b16 %v1522, %v1520
    %v1559 = vpack.c.b16 %v1523, %v1521
    %v1560 = vpack.c.b16 %v1526, %v1524
    %v1561 = vpack.c.b16 %v1527, %v1525
    %v1562 = vpack.c.b16 %v1530, %v1528
    %v1563 = vpack.c.b16 %v1531, %v1529
    %1596 = vmatpush.bf16.msra.mxu0 %v1546
    %1597 = vmatpush.bf16.msra.mxu0 %v1544
    %1598 = vmatpush.bf16.msra.mxu0 %v1542
    %1599 = vmatpush.bf16.msra.mxu0 %v1540
    %1600 = vmatpush.bf16.msra.mxu0 %v1538
    %1601 = vmatpush.bf16.msra.mxu0 %v1536
    %1602 = vmatpush.bf16.msra.mxu0 %v1534
    %1603 = vmatpush.bf16.msra.mxu0 %v1532
    %1604 = vmatmul.bf16.gmra.mxu0 %v1432
    %v1605 = vpop.f32.mrf.mxu0
    %v1606 = vadd.f32 0.0, %v1605
    %v1607 = vpop.f32.mrf.mxu0
    %1608 = vdwg.mxu0
    %1609 = vmatpush.bf16.msra.mxu0 %v1562
    %1610 = vmatpush.bf16.msra.mxu0 %v1560
    %1611 = vmatpush.bf16.msra.mxu0 %v1558
    %1612 = vmatpush.bf16.msra.mxu0 %v1556
    %1613 = vmatpush.bf16.msra.mxu0 %v1554
    %1614 = vmatpush.bf16.msra.mxu0 %v1552
    %1615 = vmatpush.bf16.msra.mxu0 %v1550
    %1616 = vmatpush.bf16.msra.mxu0 %v1548
    %1617 = vmatmul.bf16.gmra.mxu0 %v1433
    %v1618 = vpop.f32.mrf.mxu0
    %v1619 = vadd.f32 %v1606, %v1618
    %v1620 = vpop.f32.mrf.mxu0
    %1621 = vdwg.mxu0
    %1622 = vmatpush.bf16.msra.mxu0 %v1547
    %1623 = vmatpush.bf16.msra.mxu0 %v1545
    %1624 = vmatpush.bf16.msra.mxu0 %v1543
    %1625 = vmatpush.bf16.msra.mxu0 %v1541
    %1626 = vmatpush.bf16.msra.mxu0 %v1539
    %1627 = vmatpush.bf16.msra.mxu0 %v1537
    %1628 = vmatpush.bf16.msra.mxu0 %v1535
    %1629 = vmatpush.bf16.msra.mxu0 %v1533
    %1630 = vmatmul.bf16.gmra.mxu0 %v1432
    %v1631 = vpop.f32.mrf.mxu0
    %v1632 = vadd.f32 0.0, %v1631
    %v1633 = vpop.f32.mrf.mxu0
    %1634 = vdwg.mxu0
    %1635 = vmatpush.bf16.msra.mxu0 %v1563
    %1636 = vmatpush.bf16.msra.mxu0 %v1561
    %1637 = vmatpush.bf16.msra.mxu0 %v1559
    %1638 = vmatpush.bf16.msra.mxu0 %v1557
    %1639 = vmatpush.bf16.msra.mxu0 %v1555
    %1640 = vmatpush.bf16.msra.mxu0 %v1553
    %1641 = vmatpush.bf16.msra.mxu0 %v1551
    %1642 = vmatpush.bf16.msra.mxu0 %v1549
    %1643 = vmatmul.bf16.gmra.mxu0 %v1433
    %v1644 = vpop.f32.mrf.mxu0
    %v1645 = vadd.f32 %v1632, %v1644
    %v1646 = vpop.f32.mrf.mxu0
    %1647 = vdwg.mxu0
    %v1648 = vadd.f32 %v1394, %v1619
    %v1649 = vadd.f32 %v1395, %v1645
    %1650 = vst [vmem:[#allocation2] sm:$0xff] %v1648
    %1651 = vst [vmem:[#allocation2 + $0x8] sm:$0xff] %v1649
    %v1652 = vld [vmem:[#allocation2] sm:$0xff]
    %v1653 = vld [vmem:[#allocation2 + $0x8] sm:$0xff]
    %s1654 = scalar_lea.vmem [#allocation5], 1280
    %v1655 = vld [vmem:[%s1654] sm:$0xff]
    %v1656 = vld [vmem:[%s1654 + $0x8] sm:$0xff]
    %v1657 = vld [vmem:[%s1654 + $0x10] sm:$0xff]
    %v1658 = vld [vmem:[%s1654 + $0x18] sm:$0xff]
    %v1659 = vld [vmem:[%s1654 + $0x20] sm:$0xff]
    %v1660 = vld [vmem:[%s1654 + $0x28] sm:$0xff]
    %v1661 = vld [vmem:[%s1654 + $0x30] sm:$0xff]
    %v1662 = vld [vmem:[%s1654 + $0x38] sm:$0xff]
    %v1663 = vld [vmem:[%s1654 + $0x40] sm:$0xff]
    %v1664 = vld [vmem:[%s1654 + $0x48] sm:$0xff]
    %v1665 = vld [vmem:[%s1654 + $0x50] sm:$0xff]
    %v1666 = vld [vmem:[%s1654 + $0x58] sm:$0xff]
    %v1667 = vld [vmem:[%s1654 + $0x60] sm:$0xff]
    %v1668 = vld [vmem:[%s1654 + $0x68] sm:$0xff]
    %v1669 = vld [vmem:[%s1654 + $0x70] sm:$0xff]
    %v1670 = vld [vmem:[%s1654 + $0x78] sm:$0xff]
    %v1671 = vld [vmem:[%s1654 + $0x80] sm:$0xff]
    %v1672 = vld [vmem:[%s1654 + $0x88] sm:$0xff]
    %v1673 = vld [vmem:[%s1654 + $0x90] sm:$0xff]
    %v1674 = vld [vmem:[%s1654 + $0x98] sm:$0xff]
    %v1675 = vld [vmem:[%s1654 + $0xa0] sm:$0xff]
    %v1676 = vld [vmem:[%s1654 + $0xa8] sm:$0xff]
    %v1677 = vld [vmem:[%s1654 + $0xb0] sm:$0xff]
    %v1678 = vld [vmem:[%s1654 + $0xb8] sm:$0xff]
    %v1679 = vld [vmem:[%s1654 + $0xc0] sm:$0xff]
    %v1680 = vld [vmem:[%s1654 + $0xc8] sm:$0xff]
    %v1681 = vld [vmem:[%s1654 + $0xd0] sm:$0xff]
    %v1682 = vld [vmem:[%s1654 + $0xd8] sm:$0xff]
    %v1683 = vld [vmem:[%s1654 + $0xe0] sm:$0xff]
    %v1684 = vld [vmem:[%s1654 + $0xe8] sm:$0xff]
    %v1685 = vld [vmem:[%s1654 + $0xf0] sm:$0xff]
    %v1686 = vld [vmem:[%s1654 + $0xf8] sm:$0xff]
    %v1688 = vunpack.c.l.b16 %v364
    %v1689 = vunpack.c.h.b16 %v364
    %v1690 = vpack.c.b16 %v1688, %v1688
    %v1691 = vpack.c.b16 %v1689, %v1689
    %v1726 = vunpack.c.l.b16 %v1655
    %v1727 = vunpack.c.h.b16 %v1655
    %v1728 = vunpack.c.l.b16 %v1656
    %v1729 = vunpack.c.h.b16 %v1656
    %v1730 = vunpack.c.l.b16 %v1657
    %v1731 = vunpack.c.h.b16 %v1657
    %v1732 = vunpack.c.l.b16 %v1658
    %v1733 = vunpack.c.h.b16 %v1658
    %v1734 = vunpack.c.l.b16 %v1659
    %v1735 = vunpack.c.h.b16 %v1659
    %v1736 = vunpack.c.l.b16 %v1660
    %v1737 = vunpack.c.h.b16 %v1660
    %v1738 = vunpack.c.l.b16 %v1661
    %v1739 = vunpack.c.h.b16 %v1661
    %v1740 = vunpack.c.l.b16 %v1662
    %v1741 = vunpack.c.h.b16 %v1662
    %v1742 = vunpack.c.l.b16 %v1663
    %v1743 = vunpack.c.h.b16 %v1663
    %v1744 = vunpack.c.l.b16 %v1664
    %v1745 = vunpack.c.h.b16 %v1664
    %v1746 = vunpack.c.l.b16 %v1665
    %v1747 = vunpack.c.h.b16 %v1665
    %v1748 = vunpack.c.l.b16 %v1666
    %v1749 = vunpack.c.h.b16 %v1666
    %v1750 = vunpack.c.l.b16 %v1667
    %v1751 = vunpack.c.h.b16 %v1667
    %v1752 = vunpack.c.l.b16 %v1668
    %v1753 = vunpack.c.h.b16 %v1668
    %v1754 = vunpack.c.l.b16 %v1669
    %v1755 = vunpack.c.h.b16 %v1669
    %v1756 = vunpack.c.l.b16 %v1670
    %v1757 = vunpack.c.h.b16 %v1670
    %v1758 = vunpack.c.l.b16 %v1671
    %v1759 = vunpack.c.h.b16 %v1671
    %v1760 = vunpack.c.l.b16 %v1672
    %v1761 = vunpack.c.h.b16 %v1672
    %v1762 = vunpack.c.l.b16 %v1673
    %v1763 = vunpack.c.h.b16 %v1673
    %v1764 = vunpack.c.l.b16 %v1674
    %v1765 = vunpack.c.h.b16 %v1674
    %v1766 = vunpack.c.l.b16 %v1675
    %v1767 = vunpack.c.h.b16 %v1675
    %v1768 = vunpack.c.l.b16 %v1676
    %v1769 = vunpack.c.h.b16 %v1676
    %v1770 = vunpack.c.l.b16 %v1677
    %v1771 = vunpack.c.h.b16 %v1677
    %v1772 = vunpack.c.l.b16 %v1678
    %v1773 = vunpack.c.h.b16 %v1678
    %v1774 = vunpack.c.l.b16 %v1679
    %v1775 = vunpack.c.h.b16 %v1679
    %v1776 = vunpack.c.l.b16 %v1680
    %v1777 = vunpack.c.h.b16 %v1680
    %v1778 = vunpack.c.l.b16 %v1681
    %v1779 = vunpack.c.h.b16 %v1681
    %v1780 = vunpack.c.l.b16 %v1682
    %v1781 = vunpack.c.h.b16 %v1682
    %v1782 = vunpack.c.l.b16 %v1683
    %v1783 = vunpack.c.h.b16 %v1683
    %v1784 = vunpack.c.l.b16 %v1684
    %v1785 = vunpack.c.h.b16 %v1684
    %v1786 = vunpack.c.l.b16 %v1685
    %v1787 = vunpack.c.h.b16 %v1685
    %v1788 = vunpack.c.l.b16 %v1686
    %v1789 = vunpack.c.h.b16 %v1686
    %v1790 = vpack.c.b16 %v1728, %v1726
    %v1791 = vpack.c.b16 %v1729, %v1727
    %v1792 = vpack.c.b16 %v1732, %v1730
    %v1793 = vpack.c.b16 %v1733, %v1731
    %v1794 = vpack.c.b16 %v1736, %v1734
    %v1795 = vpack.c.b16 %v1737, %v1735
    %v1796 = vpack.c.b16 %v1740, %v1738
    %v1797 = vpack.c.b16 %v1741, %v1739
    %v1798 = vpack.c.b16 %v1744, %v1742
    %v1799 = vpack.c.b16 %v1745, %v1743
    %v1800 = vpack.c.b16 %v1748, %v1746
    %v1801 = vpack.c.b16 %v1749, %v1747
    %v1802 = vpack.c.b16 %v1752, %v1750
    %v1803 = vpack.c.b16 %v1753, %v1751
    %v1804 = vpack.c.b16 %v1756, %v1754
    %v1805 = vpack.c.b16 %v1757, %v1755
    %v1806 = vpack.c.b16 %v1760, %v1758
    %v1807 = vpack.c.b16 %v1761, %v1759
    %v1808 = vpack.c.b16 %v1764, %v1762
    %v1809 = vpack.c.b16 %v1765, %v1763
    %v1810 = vpack.c.b16 %v1768, %v1766
    %v1811 = vpack.c.b16 %v1769, %v1767
    %v1812 = vpack.c.b16 %v1772, %v1770
    %v1813 = vpack.c.b16 %v1773, %v1771
    %v1814 = vpack.c.b16 %v1776, %v1774
    %v1815 = vpack.c.b16 %v1777, %v1775
    %v1816 = vpack.c.b16 %v1780, %v1778
    %v1817 = vpack.c.b16 %v1781, %v1779
    %v1818 = vpack.c.b16 %v1784, %v1782
    %v1819 = vpack.c.b16 %v1785, %v1783
    %v1820 = vpack.c.b16 %v1788, %v1786
    %v1821 = vpack.c.b16 %v1789, %v1787
    %1854 = vmatpush.bf16.msra.mxu0 %v1804
    %1855 = vmatpush.bf16.msra.mxu0 %v1802
    %1856 = vmatpush.bf16.msra.mxu0 %v1800
    %1857 = vmatpush.bf16.msra.mxu0 %v1798
    %1858 = vmatpush.bf16.msra.mxu0 %v1796
    %1859 = vmatpush.bf16.msra.mxu0 %v1794
    %1860 = vmatpush.bf16.msra.mxu0 %v1792
    %1861 = vmatpush.bf16.msra.mxu0 %v1790
    %1862 = vmatmul.bf16.gmra.mxu0 %v1690
    %v1863 = vpop.f32.mrf.mxu0
    %v1864 = vadd.f32 0.0, %v1863
    %v1865 = vpop.f32.mrf.mxu0
    %1866 = vdwg.mxu0
    %1867 = vmatpush.bf16.msra.mxu0 %v1820
    %1868 = vmatpush.bf16.msra.mxu0 %v1818
    %1869 = vmatpush.bf16.msra.mxu0 %v1816
    %1870 = vmatpush.bf16.msra.mxu0 %v1814
    %1871 = vmatpush.bf16.msra.mxu0 %v1812
    %1872 = vmatpush.bf16.msra.mxu0 %v1810
    %1873 = vmatpush.bf16.msra.mxu0 %v1808
    %1874 = vmatpush.bf16.msra.mxu0 %v1806
    %1875 = vmatmul.bf16.gmra.mxu0 %v1691
    %v1876 = vpop.f32.mrf.mxu0
    %v1877 = vadd.f32 %v1864, %v1876
    %v1878 = vpop.f32.mrf.mxu0
    %1879 = vdwg.mxu0
    %1880 = vmatpush.bf16.msra.mxu0 %v1805
    %1881 = vmatpush.bf16.msra.mxu0 %v1803
    %1882 = vmatpush.bf16.msra.mxu0 %v1801
    %1883 = vmatpush.bf16.msra.mxu0 %v1799
    %1884 = vmatpush.bf16.msra.mxu0 %v1797
    %1885 = vmatpush.bf16.msra.mxu0 %v1795
    %1886 = vmatpush.bf16.msra.mxu0 %v1793
    %1887 = vmatpush.bf16.msra.mxu0 %v1791
    %1888 = vmatmul.bf16.gmra.mxu0 %v1690
    %v1889 = vpop.f32.mrf.mxu0
    %v1890 = vadd.f32 0.0, %v1889
    %v1891 = vpop.f32.mrf.mxu0
    %1892 = vdwg.mxu0
    %1893 = vmatpush.bf16.msra.mxu0 %v1821
    %1894 = vmatpush.bf16.msra.mxu0 %v1819
    %1895 = vmatpush.bf16.msra.mxu0 %v1817
    %1896 = vmatpush.bf16.msra.mxu0 %v1815
    %1897 = vmatpush.bf16.msra.mxu0 %v1813
    %1898 = vmatpush.bf16.msra.mxu0 %v1811
    %1899 = vmatpush.bf16.msra.mxu0 %v1809
    %1900 = vmatpush.bf16.msra.mxu0 %v1807
    %1901 = vmatmul.bf16.gmra.mxu0 %v1691
    %v1902 = vpop.f32.mrf.mxu0
    %v1903 = vadd.f32 %v1890, %v1902
    %v1904 = vpop.f32.mrf.mxu0
    %1905 = vdwg.mxu0
    %v1906 = vadd.f32 %v1652, %v1877
    %v1907 = vadd.f32 %v1653, %v1903
    %1908 = vst [vmem:[#allocation2] sm:$0xff] %v1906
    %1909 = vst [vmem:[#allocation2 + $0x8] sm:$0xff] %v1907
    %v1910 = vld [vmem:[#allocation2] sm:$0xff]
    %v1911 = vld [vmem:[#allocation2 + $0x8] sm:$0xff]
    %s1912 = scalar_lea.vmem [#allocation5], 1536
    %v1913 = vld [vmem:[%s1912] sm:$0xff]
    %v1914 = vld [vmem:[%s1912 + $0x8] sm:$0xff]
    %v1915 = vld [vmem:[%s1912 + $0x10] sm:$0xff]
    %v1916 = vld [vmem:[%s1912 + $0x18] sm:$0xff]
    %v1917 = vld [vmem:[%s1912 + $0x20] sm:$0xff]
    %v1918 = vld [vmem:[%s1912 + $0x28] sm:$0xff]
    %v1919 = vld [vmem:[%s1912 + $0x30] sm:$0xff]
    %v1920 = vld [vmem:[%s1912 + $0x38] sm:$0xff]
    %v1921 = vld [vmem:[%s1912 + $0x40] sm:$0xff]
    %v1922 = vld [vmem:[%s1912 + $0x48] sm:$0xff]
    %v1923 = vld [vmem:[%s1912 + $0x50] sm:$0xff]
    %v1924 = vld [vmem:[%s1912 + $0x58] sm:$0xff]
    %v1925 = vld [vmem:[%s1912 + $0x60] sm:$0xff]
    %v1926 = vld [vmem:[%s1912 + $0x68] sm:$0xff]
    %v1927 = vld [vmem:[%s1912 + $0x70] sm:$0xff]
    %v1928 = vld [vmem:[%s1912 + $0x78] sm:$0xff]
    %v1929 = vld [vmem:[%s1912 + $0x80] sm:$0xff]
    %v1930 = vld [vmem:[%s1912 + $0x88] sm:$0xff]
    %v1931 = vld [vmem:[%s1912 + $0x90] sm:$0xff]
    %v1932 = vld [vmem:[%s1912 + $0x98] sm:$0xff]
    %v1933 = vld [vmem:[%s1912 + $0xa0] sm:$0xff]
    %v1934 = vld [vmem:[%s1912 + $0xa8] sm:$0xff]
    %v1935 = vld [vmem:[%s1912 + $0xb0] sm:$0xff]
    %v1936 = vld [vmem:[%s1912 + $0xb8] sm:$0xff]
    %v1937 = vld [vmem:[%s1912 + $0xc0] sm:$0xff]
    %v1938 = vld [vmem:[%s1912 + $0xc8] sm:$0xff]
    %v1939 = vld [vmem:[%s1912 + $0xd0] sm:$0xff]
    %v1940 = vld [vmem:[%s1912 + $0xd8] sm:$0xff]
    %v1941 = vld [vmem:[%s1912 + $0xe0] sm:$0xff]
    %v1942 = vld [vmem:[%s1912 + $0xe8] sm:$0xff]
    %v1943 = vld [vmem:[%s1912 + $0xf0] sm:$0xff]
    %v1944 = vld [vmem:[%s1912 + $0xf8] sm:$0xff]
    %v1946 = vunpack.c.l.b16 %v365
    %v1947 = vunpack.c.h.b16 %v365
    %v1948 = vpack.c.b16 %v1946, %v1946
    %v1949 = vpack.c.b16 %v1947, %v1947
    %v1984 = vunpack.c.l.b16 %v1913
    %v1985 = vunpack.c.h.b16 %v1913
    %v1986 = vunpack.c.l.b16 %v1914
    %v1987 = vunpack.c.h.b16 %v1914
    %v1988 = vunpack.c.l.b16 %v1915
    %v1989 = vunpack.c.h.b16 %v1915
    %v1990 = vunpack.c.l.b16 %v1916
    %v1991 = vunpack.c.h.b16 %v1916
    %v1992 = vunpack.c.l.b16 %v1917
    %v1993 = vunpack.c.h.b16 %v1917
    %v1994 = vunpack.c.l.b16 %v1918
    %v1995 = vunpack.c.h.b16 %v1918
    %v1996 = vunpack.c.l.b16 %v1919
    %v1997 = vunpack.c.h.b16 %v1919
    %v1998 = vunpack.c.l.b16 %v1920
    %v1999 = vunpack.c.h.b16 %v1920
    %v2000 = vunpack.c.l.b16 %v1921
    %v2001 = vunpack.c.h.b16 %v1921
    %v2002 = vunpack.c.l.b16 %v1922
    %v2003 = vunpack.c.h.b16 %v1922
    %v2004 = vunpack.c.l.b16 %v1923
    %v2005 = vunpack.c.h.b16 %v1923
    %v2006 = vunpack.c.l.b16 %v1924
    %v2007 = vunpack.c.h.b16 %v1924
    %v2008 = vunpack.c.l.b16 %v1925
    %v2009 = vunpack.c.h.b16 %v1925
    %v2010 = vunpack.c.l.b16 %v1926
    %v2011 = vunpack.c.h.b16 %v1926
    %v2012 = vunpack.c.l.b16 %v1927
    %v2013 = vunpack.c.h.b16 %v1927
    %v2014 = vunpack.c.l.b16 %v1928
    %v2015 = vunpack.c.h.b16 %v1928
    %v2016 = vunpack.c.l.b16 %v1929
    %v2017 = vunpack.c.h.b16 %v1929
    %v2018 = vunpack.c.l.b16 %v1930
    %v2019 = vunpack.c.h.b16 %v1930
    %v2020 = vunpack.c.l.b16 %v1931
    %v2021 = vunpack.c.h.b16 %v1931
    %v2022 = vunpack.c.l.b16 %v1932
    %v2023 = vunpack.c.h.b16 %v1932
    %v2024 = vunpack.c.l.b16 %v1933
    %v2025 = vunpack.c.h.b16 %v1933
    %v2026 = vunpack.c.l.b16 %v1934
    %v2027 = vunpack.c.h.b16 %v1934
    %v2028 = vunpack.c.l.b16 %v1935
    %v2029 = vunpack.c.h.b16 %v1935
    %v2030 = vunpack.c.l.b16 %v1936
    %v2031 = vunpack.c.h.b16 %v1936
    %v2032 = vunpack.c.l.b16 %v1937
    %v2033 = vunpack.c.h.b16 %v1937
    %v2034 = vunpack.c.l.b16 %v1938
    %v2035 = vunpack.c.h.b16 %v1938
    %v2036 = vunpack.c.l.b16 %v1939
    %v2037 = vunpack.c.h.b16 %v1939
    %v2038 = vunpack.c.l.b16 %v1940
    %v2039 = vunpack.c.h.b16 %v1940
    %v2040 = vunpack.c.l.b16 %v1941
    %v2041 = vunpack.c.h.b16 %v1941
    %v2042 = vunpack.c.l.b16 %v1942
    %v2043 = vunpack.c.h.b16 %v1942
    %v2044 = vunpack.c.l.b16 %v1943
    %v2045 = vunpack.c.h.b16 %v1943
    %v2046 = vunpack.c.l.b16 %v1944
    %v2047 = vunpack.c.h.b16 %v1944
    %v2048 = vpack.c.b16 %v1986, %v1984
    %v2049 = vpack.c.b16 %v1987, %v1985
    %v2050 = vpack.c.b16 %v1990, %v1988
    %v2051 = vpack.c.b16 %v1991, %v1989
    %v2052 = vpack.c.b16 %v1994, %v1992
    %v2053 = vpack.c.b16 %v1995, %v1993
    %v2054 = vpack.c.b16 %v1998, %v1996
    %v2055 = vpack.c.b16 %v1999, %v1997
    %v2056 = vpack.c.b16 %v2002, %v2000
    %v2057 = vpack.c.b16 %v2003, %v2001
    %v2058 = vpack.c.b16 %v2006, %v2004
    %v2059 = vpack.c.b16 %v2007, %v2005
    %v2060 = vpack.c.b16 %v2010, %v2008
    %v2061 = vpack.c.b16 %v2011, %v2009
    %v2062 = vpack.c.b16 %v2014, %v2012
    %v2063 = vpack.c.b16 %v2015, %v2013
    %v2064 = vpack.c.b16 %v2018, %v2016
    %v2065 = vpack.c.b16 %v2019, %v2017
    %v2066 = vpack.c.b16 %v2022, %v2020
    %v2067 = vpack.c.b16 %v2023, %v2021
    %v2068 = vpack.c.b16 %v2026, %v2024
    %v2069 = vpack.c.b16 %v2027, %v2025
    %v2070 = vpack.c.b16 %v2030, %v2028
    %v2071 = vpack.c.b16 %v2031, %v2029
    %v2072 = vpack.c.b16 %v2034, %v2032
    %v2073 = vpack.c.b16 %v2035, %v2033
    %v2074 = vpack.c.b16 %v2038, %v2036
    %v2075 = vpack.c.b16 %v2039, %v2037
    %v2076 = vpack.c.b16 %v2042, %v2040
    %v2077 = vpack.c.b16 %v2043, %v2041
    %v2078 = vpack.c.b16 %v2046, %v2044
    %v2079 = vpack.c.b16 %v2047, %v2045
    %2112 = vmatpush.bf16.msra.mxu0 %v2062
    %2113 = vmatpush.bf16.msra.mxu0 %v2060
    %2114 = vmatpush.bf16.msra.mxu0 %v2058
    %2115 = vmatpush.bf16.msra.mxu0 %v2056
    %2116 = vmatpush.bf16.msra.mxu0 %v2054
    %2117 = vmatpush.bf16.msra.mxu0 %v2052
    %2118 = vmatpush.bf16.msra.mxu0 %v2050
    %2119 = vmatpush.bf16.msra.mxu0 %v2048
    %2120 = vmatmul.bf16.gmra.mxu0 %v1948
    %v2121 = vpop.f32.mrf.mxu0
    %v2122 = vadd.f32 0.0, %v2121
    %v2123 = vpop.f32.mrf.mxu0
    %2124 = vdwg.mxu0
    %2125 = vmatpush.bf16.msra.mxu0 %v2078
    %2126 = vmatpush.bf16.msra.mxu0 %v2076
    %2127 = vmatpush.bf16.msra.mxu0 %v2074
    %2128 = vmatpush.bf16.msra.mxu0 %v2072
    %2129 = vmatpush.bf16.msra.mxu0 %v2070
    %2130 = vmatpush.bf16.msra.mxu0 %v2068
    %2131 = vmatpush.bf16.msra.mxu0 %v2066
    %2132 = vmatpush.bf16.msra.mxu0 %v2064
    %2133 = vmatmul.bf16.gmra.mxu0 %v1949
    %v2134 = vpop.f32.mrf.mxu0
    %v2135 = vadd.f32 %v2122, %v2134
    %v2136 = vpop.f32.mrf.mxu0
    %2137 = vdwg.mxu0
    %2138 = vmatpush.bf16.msra.mxu0 %v2063
    %2139 = vmatpush.bf16.msra.mxu0 %v2061
    %2140 = vmatpush.bf16.msra.mxu0 %v2059
    %2141 = vmatpush.bf16.msra.mxu0 %v2057
    %2142 = vmatpush.bf16.msra.mxu0 %v2055
    %2143 = vmatpush.bf16.msra.mxu0 %v2053
    %2144 = vmatpush.bf16.msra.mxu0 %v2051
    %2145 = vmatpush.bf16.msra.mxu0 %v2049
    %2146 = vmatmul.bf16.gmra.mxu0 %v1948
    %v2147 = vpop.f32.mrf.mxu0
    %v2148 = vadd.f32 0.0, %v2147
    %v2149 = vpop.f32.mrf.mxu0
    %2150 = vdwg.mxu0
    %2151 = vmatpush.bf16.msra.mxu0 %v2079
    %2152 = vmatpush.bf16.msra.mxu0 %v2077
    %2153 = vmatpush.bf16.msra.mxu0 %v2075
    %2154 = vmatpush.bf16.msra.mxu0 %v2073
    %2155 = vmatpush.bf16.msra.mxu0 %v2071
    %2156 = vmatpush.bf16.msra.mxu0 %v2069
    %2157 = vmatpush.bf16.msra.mxu0 %v2067
    %2158 = vmatpush.bf16.msra.mxu0 %v2065
    %2159 = vmatmul.bf16.gmra.mxu0 %v1949
    %v2160 = vpop.f32.mrf.mxu0
    %v2161 = vadd.f32 %v2148, %v2160
    %v2162 = vpop.f32.mrf.mxu0
    %2163 = vdwg.mxu0
    %v2164 = vadd.f32 %v1910, %v2135
    %v2165 = vadd.f32 %v1911, %v2161
    %2166 = vst [vmem:[#allocation2] sm:$0xff] %v2164
    %2167 = vst [vmem:[#allocation2 + $0x8] sm:$0xff] %v2165
    %v2168 = vld [vmem:[#allocation2] sm:$0xff]
    %v2169 = vld [vmem:[#allocation2 + $0x8] sm:$0xff]
    %s2170 = scalar_lea.vmem [#allocation5], 1792
    %v2171 = vld [vmem:[%s2170] sm:$0xff]
    %v2172 = vld [vmem:[%s2170 + $0x8] sm:$0xff]
    %v2173 = vld [vmem:[%s2170 + $0x10] sm:$0xff]
    %v2174 = vld [vmem:[%s2170 + $0x18] sm:$0xff]
    %v2175 = vld [vmem:[%s2170 + $0x20] sm:$0xff]
    %v2176 = vld [vmem:[%s2170 + $0x28] sm:$0xff]
    %v2177 = vld [vmem:[%s2170 + $0x30] sm:$0xff]
    %v2178 = vld [vmem:[%s2170 + $0x38] sm:$0xff]
    %v2179 = vld [vmem:[%s2170 + $0x40] sm:$0xff]
    %v2180 = vld [vmem:[%s2170 + $0x48] sm:$0xff]
    %v2181 = vld [vmem:[%s2170 + $0x50] sm:$0xff]
    %v2182 = vld [vmem:[%s2170 + $0x58] sm:$0xff]
    %v2183 = vld [vmem:[%s2170 + $0x60] sm:$0xff]
    %v2184 = vld [vmem:[%s2170 + $0x68] sm:$0xff]
    %v2185 = vld [vmem:[%s2170 + $0x70] sm:$0xff]
    %v2186 = vld [vmem:[%s2170 + $0x78] sm:$0xff]
    %v2187 = vld [vmem:[%s2170 + $0x80] sm:$0xff]
    %v2188 = vld [vmem:[%s2170 + $0x88] sm:$0xff]
    %v2189 = vld [vmem:[%s2170 + $0x90] sm:$0xff]
    %v2190 = vld [vmem:[%s2170 + $0x98] sm:$0xff]
    %v2191 = vld [vmem:[%s2170 + $0xa0] sm:$0xff]
    %v2192 = vld [vmem:[%s2170 + $0xa8] sm:$0xff]
    %v2193 = vld [vmem:[%s2170 + $0xb0] sm:$0xff]
    %v2194 = vld [vmem:[%s2170 + $0xb8] sm:$0xff]
    %v2195 = vld [vmem:[%s2170 + $0xc0] sm:$0xff]
    %v2196 = vld [vmem:[%s2170 + $0xc8] sm:$0xff]
    %v2197 = vld [vmem:[%s2170 + $0xd0] sm:$0xff]
    %v2198 = vld [vmem:[%s2170 + $0xd8] sm:$0xff]
    %v2199 = vld [vmem:[%s2170 + $0xe0] sm:$0xff]
    %v2200 = vld [vmem:[%s2170 + $0xe8] sm:$0xff]
    %v2201 = vld [vmem:[%s2170 + $0xf0] sm:$0xff]
    %v2202 = vld [vmem:[%s2170 + $0xf8] sm:$0xff]
    %v2204 = vunpack.c.l.b16 %v366
    %v2205 = vunpack.c.h.b16 %v366
    %v2206 = vpack.c.b16 %v2204, %v2204
    %v2207 = vpack.c.b16 %v2205, %v2205
    %v2242 = vunpack.c.l.b16 %v2171
    %v2243 = vunpack.c.h.b16 %v2171
    %v2244 = vunpack.c.l.b16 %v2172
    %v2245 = vunpack.c.h.b16 %v2172
    %v2246 = vunpack.c.l.b16 %v2173
    %v2247 = vunpack.c.h.b16 %v2173
    %v2248 = vunpack.c.l.b16 %v2174
    %v2249 = vunpack.c.h.b16 %v2174
    %v2250 = vunpack.c.l.b16 %v2175
    %v2251 = vunpack.c.h.b16 %v2175
    %v2252 = vunpack.c.l.b16 %v2176
    %v2253 = vunpack.c.h.b16 %v2176
    %v2254 = vunpack.c.l.b16 %v2177
    %v2255 = vunpack.c.h.b16 %v2177
    %v2256 = vunpack.c.l.b16 %v2178
    %v2257 = vunpack.c.h.b16 %v2178
    %v2258 = vunpack.c.l.b16 %v2179
    %v2259 = vunpack.c.h.b16 %v2179
    %v2260 = vunpack.c.l.b16 %v2180
    %v2261 = vunpack.c.h.b16 %v2180
    %v2262 = vunpack.c.l.b16 %v2181
    %v2263 = vunpack.c.h.b16 %v2181
    %v2264 = vunpack.c.l.b16 %v2182
    %v2265 = vunpack.c.h.b16 %v2182
    %v2266 = vunpack.c.l.b16 %v2183
    %v2267 = vunpack.c.h.b16 %v2183
    %v2268 = vunpack.c.l.b16 %v2184
    %v2269 = vunpack.c.h.b16 %v2184
    %v2270 = vunpack.c.l.b16 %v2185
    %v2271 = vunpack.c.h.b16 %v2185
    %v2272 = vunpack.c.l.b16 %v2186
    %v2273 = vunpack.c.h.b16 %v2186
    %v2274 = vunpack.c.l.b16 %v2187
    %v2275 = vunpack.c.h.b16 %v2187
    %v2276 = vunpack.c.l.b16 %v2188
    %v2277 = vunpack.c.h.b16 %v2188
    %v2278 = vunpack.c.l.b16 %v2189
    %v2279 = vunpack.c.h.b16 %v2189
    %v2280 = vunpack.c.l.b16 %v2190
    %v2281 = vunpack.c.h.b16 %v2190
    %v2282 = vunpack.c.l.b16 %v2191
    %v2283 = vunpack.c.h.b16 %v2191
    %v2284 = vunpack.c.l.b16 %v2192
    %v2285 = vunpack.c.h.b16 %v2192
    %v2286 = vunpack.c.l.b16 %v2193
    %v2287 = vunpack.c.h.b16 %v2193
    %v2288 = vunpack.c.l.b16 %v2194
    %v2289 = vunpack.c.h.b16 %v2194
    %v2290 = vunpack.c.l.b16 %v2195
    %v2291 = vunpack.c.h.b16 %v2195
    %v2292 = vunpack.c.l.b16 %v2196
    %v2293 = vunpack.c.h.b16 %v2196
    %v2294 = vunpack.c.l.b16 %v2197
    %v2295 = vunpack.c.h.b16 %v2197
    %v2296 = vunpack.c.l.b16 %v2198
    %v2297 = vunpack.c.h.b16 %v2198
    %v2298 = vunpack.c.l.b16 %v2199
    %v2299 = vunpack.c.h.b16 %v2199
    %v2300 = vunpack.c.l.b16 %v2200
    %v2301 = vunpack.c.h.b16 %v2200
    %v2302 = vunpack.c.l.b16 %v2201
    %v2303 = vunpack.c.h.b16 %v2201
    %v2304 = vunpack.c.l.b16 %v2202
    %v2305 = vunpack.c.h.b16 %v2202
    %v2306 = vpack.c.b16 %v2244, %v2242
    %v2307 = vpack.c.b16 %v2245, %v2243
    %v2308 = vpack.c.b16 %v2248, %v2246
    %v2309 = vpack.c.b16 %v2249, %v2247
    %v2310 = vpack.c.b16 %v2252, %v2250
    %v2311 = vpack.c.b16 %v2253, %v2251
    %v2312 = vpack.c.b16 %v2256, %v2254
    %v2313 = vpack.c.b16 %v2257, %v2255
    %v2314 = vpack.c.b16 %v2260, %v2258
    %v2315 = vpack.c.b16 %v2261, %v2259
    %v2316 = vpack.c.b16 %v2264, %v2262
    %v2317 = vpack.c.b16 %v2265, %v2263
    %v2318 = vpack.c.b16 %v2268, %v2266
    %v2319 = vpack.c.b16 %v2269, %v2267
    %v2320 = vpack.c.b16 %v2272, %v2270
    %v2321 = vpack.c.b16 %v2273, %v2271
    %v2322 = vpack.c.b16 %v2276, %v2274
    %v2323 = vpack.c.b16 %v2277, %v2275
    %v2324 = vpack.c.b16 %v2280, %v2278
    %v2325 = vpack.c.b16 %v2281, %v2279
    %v2326 = vpack.c.b16 %v2284, %v2282
    %v2327 = vpack.c.b16 %v2285, %v2283
    %v2328 = vpack.c.b16 %v2288, %v2286
    %v2329 = vpack.c.b16 %v2289, %v2287
    %v2330 = vpack.c.b16 %v2292, %v2290
    %v2331 = vpack.c.b16 %v2293, %v2291
    %v2332 = vpack.c.b16 %v2296, %v2294
    %v2333 = vpack.c.b16 %v2297, %v2295
    %v2334 = vpack.c.b16 %v2300, %v2298
    %v2335 = vpack.c.b16 %v2301, %v2299
    %v2336 = vpack.c.b16 %v2304, %v2302
    %v2337 = vpack.c.b16 %v2305, %v2303
    %2370 = vmatpush.bf16.msra.mxu0 %v2320
    %2371 = vmatpush.bf16.msra.mxu0 %v2318
    %2372 = vmatpush.bf16.msra.mxu0 %v2316
    %2373 = vmatpush.bf16.msra.mxu0 %v2314
    %2374 = vmatpush.bf16.msra.mxu0 %v2312
    %2375 = vmatpush.bf16.msra.mxu0 %v2310
    %2376 = vmatpush.bf16.msra.mxu0 %v2308
    %2377 = vmatpush.bf16.msra.mxu0 %v2306
    %2378 = vmatmul.bf16.gmra.mxu0 %v2206
    %v2379 = vpop.f32.mrf.mxu0
    %v2380 = vadd.f32 0.0, %v2379
    %v2381 = vpop.f32.mrf.mxu0
    %2382 = vdwg.mxu0
    %2383 = vmatpush.bf16.msra.mxu0 %v2336
    %2384 = vmatpush.bf16.msra.mxu0 %v2334
    %2385 = vmatpush.bf16.msra.mxu0 %v2332
    %2386 = vmatpush.bf16.msra.mxu0 %v2330
    %2387 = vmatpush.bf16.msra.mxu0 %v2328
    %2388 = vmatpush.bf16.msra.mxu0 %v2326
    %2389 = vmatpush.bf16.msra.mxu0 %v2324
    %2390 = vmatpush.bf16.msra.mxu0 %v2322
    %2391 = vmatmul.bf16.gmra.mxu0 %v2207
    %v2392 = vpop.f32.mrf.mxu0
    %v2393 = vadd.f32 %v2380, %v2392
    %v2394 = vpop.f32.mrf.mxu0
    %2395 = vdwg.mxu0
    %2396 = vmatpush.bf16.msra.mxu0 %v2321
    %2397 = vmatpush.bf16.msra.mxu0 %v2319
    %2398 = vmatpush.bf16.msra.mxu0 %v2317
    %2399 = vmatpush.bf16.msra.mxu0 %v2315
    %2400 = vmatpush.bf16.msra.mxu0 %v2313
    %2401 = vmatpush.bf16.msra.mxu0 %v2311
    %2402 = vmatpush.bf16.msra.mxu0 %v2309
    %2403 = vmatpush.bf16.msra.mxu0 %v2307
    %2404 = vmatmul.bf16.gmra.mxu0 %v2206
    %v2405 = vpop.f32.mrf.mxu0
    %v2406 = vadd.f32 0.0, %v2405
    %v2407 = vpop.f32.mrf.mxu0
    %2408 = vdwg.mxu0
    %2409 = vmatpush.bf16.msra.mxu0 %v2337
    %2410 = vmatpush.bf16.msra.mxu0 %v2335
    %2411 = vmatpush.bf16.msra.mxu0 %v2333
    %2412 = vmatpush.bf16.msra.mxu0 %v2331
    %2413 = vmatpush.bf16.msra.mxu0 %v2329
    %2414 = vmatpush.bf16.msra.mxu0 %v2327
    %2415 = vmatpush.bf16.msra.mxu0 %v2325
    %2416 = vmatpush.bf16.msra.mxu0 %v2323
    %2417 = vmatmul.bf16.gmra.mxu0 %v2207
    %v2418 = vpop.f32.mrf.mxu0
    %v2419 = vadd.f32 %v2406, %v2418
    %v2420 = vpop.f32.mrf.mxu0
    %2421 = vdwg.mxu0
    %v2422 = vadd.f32 %v2168, %v2393
    %v2423 = vadd.f32 %v2169, %v2419
    %2424 = vst [vmem:[#allocation2] sm:$0xff] %v2422
    %2425 = vst [vmem:[#allocation2 + $0x8] sm:$0xff] %v2423
    %v2426 = vld [vmem:[#allocation2] sm:$0xff]
    %v2427 = vld [vmem:[#allocation2 + $0x8] sm:$0xff]
    %v2428 = vld [vmem:[%s6] sm:$0x3]
    %v2430 = vperm.slane %v2428, 0
    %v2431 = vperm.slane %v2428, 1
    %v2434 = vadd.f32 %v2426, %v2430
    %v2435 = vadd.f32 %v2427, %v2431
    %v2436 = vmax.f32 %v2434, 0.0
    %v2437 = vmax.f32 %v2435, 0.0
    %v2438 = vpack.c.bf16 %v2436, %v2436
    %v2439 = vpack.c.bf16 %v2437, %v2437
    %v2440 = vld [vmem:[#allocation7] sm:$0xff]
    %v2441 = vld [vmem:[#allocation7 + $0x8] sm:$0xff]
    %v2442 = vld [vmem:[#allocation7 + $0x10] sm:$0xff]
    %v2443 = vld [vmem:[#allocation7 + $0x18] sm:$0xff]
    %v2444 = vld [vmem:[#allocation7 + $0x20] sm:$0xff]
    %v2445 = vld [vmem:[#allocation7 + $0x28] sm:$0xff]
    %v2446 = vld [vmem:[#allocation7 + $0x30] sm:$0xff]
    %v2447 = vld [vmem:[#allocation7 + $0x38] sm:$0xff]
    %v2448 = vld [vmem:[#allocation7 + $0x40] sm:$0xff]
    %v2449 = vld [vmem:[#allocation7 + $0x48] sm:$0xff]
    %v2450 = vld [vmem:[#allocation7 + $0x50] sm:$0xff]
    %v2451 = vld [vmem:[#allocation7 + $0x58] sm:$0xff]
    %v2452 = vld [vmem:[#allocation7 + $0x60] sm:$0xff]
    %v2453 = vld [vmem:[#allocation7 + $0x68] sm:$0xff]
    %v2454 = vld [vmem:[#allocation7 + $0x70] sm:$0xff]
    %v2455 = vld [vmem:[#allocation7 + $0x78] sm:$0xff]
    %v2456 = vld [vmem:[#allocation7 + $0x80] sm:$0xff]
    %v2457 = vld [vmem:[#allocation7 + $0x88] sm:$0xff]
    %v2458 = vld [vmem:[#allocation7 + $0x90] sm:$0xff]
    %v2459 = vld [vmem:[#allocation7 + $0x98] sm:$0xff]
    %v2460 = vld [vmem:[#allocation7 + $0xa0] sm:$0xff]
    %v2461 = vld [vmem:[#allocation7 + $0xa8] sm:$0xff]
    %v2462 = vld [vmem:[#allocation7 + $0xb0] sm:$0xff]
    %v2463 = vld [vmem:[#allocation7 + $0xb8] sm:$0xff]
    %v2464 = vld [vmem:[#allocation7 + $0xc0] sm:$0xff]
    %v2465 = vld [vmem:[#allocation7 + $0xc8] sm:$0xff]
    %v2466 = vld [vmem:[#allocation7 + $0xd0] sm:$0xff]
    %v2467 = vld [vmem:[#allocation7 + $0xd8] sm:$0xff]
    %v2468 = vld [vmem:[#allocation7 + $0xe0] sm:$0xff]
    %v2469 = vld [vmem:[#allocation7 + $0xe8] sm:$0xff]
    %v2470 = vld [vmem:[#allocation7 + $0xf0] sm:$0xff]
    %v2471 = vld [vmem:[#allocation7 + $0xf8] sm:$0xff]
    %v2472 = vld [vmem:[%s8] sm:$0x3]
    %v2474 = vperm.slane %v2472, 0
    %v2475 = vperm.slane %v2472, 1
    %v2510 = vunpack.c.l.b16 %v2440
    %v2511 = vunpack.c.h.b16 %v2440
    %v2512 = vunpack.c.l.b16 %v2441
    %v2513 = vunpack.c.h.b16 %v2441
    %v2514 = vunpack.c.l.b16 %v2442
    %v2515 = vunpack.c.h.b16 %v2442
    %v2516 = vunpack.c.l.b16 %v2443
    %v2517 = vunpack.c.h.b16 %v2443
    %v2518 = vunpack.c.l.b16 %v2444
    %v2519 = vunpack.c.h.b16 %v2444
    %v2520 = vunpack.c.l.b16 %v2445
    %v2521 = vunpack.c.h.b16 %v2445
    %v2522 = vunpack.c.l.b16 %v2446
    %v2523 = vunpack.c.h.b16 %v2446
    %v2524 = vunpack.c.l.b16 %v2447
    %v2525 = vunpack.c.h.b16 %v2447
    %v2526 = vunpack.c.l.b16 %v2448
    %v2527 = vunpack.c.h.b16 %v2448
    %v2528 = vunpack.c.l.b16 %v2449
    %v2529 = vunpack.c.h.b16 %v2449
    %v2530 = vunpack.c.l.b16 %v2450
    %v2531 = vunpack.c.h.b16 %v2450
    %v2532 = vunpack.c.l.b16 %v2451
    %v2533 = vunpack.c.h.b16 %v2451
    %v2534 = vunpack.c.l.b16 %v2452
    %v2535 = vunpack.c.h.b16 %v2452
    %v2536 = vunpack.c.l.b16 %v2453
    %v2537 = vunpack.c.h.b16 %v2453
    %v2538 = vunpack.c.l.b16 %v2454
    %v2539 = vunpack.c.h.b16 %v2454
    %v2540 = vunpack.c.l.b16 %v2455
    %v2541 = vunpack.c.h.b16 %v2455
    %v2542 = vunpack.c.l.b16 %v2456
    %v2543 = vunpack.c.h.b16 %v2456
    %v2544 = vunpack.c.l.b16 %v2457
    %v2545 = vunpack.c.h.b16 %v2457
    %v2546 = vunpack.c.l.b16 %v2458
    %v2547 = vunpack.c.h.b16 %v2458
    %v2548 = vunpack.c.l.b16 %v2459
    %v2549 = vunpack.c.h.b16 %v2459
    %v2550 = vunpack.c.l.b16 %v2460
    %v2551 = vunpack.c.h.b16 %v2460
    %v2552 = vunpack.c.l.b16 %v2461
    %v2553 = vunpack.c.h.b16 %v2461
    %v2554 = vunpack.c.l.b16 %v2462
    %v2555 = vunpack.c.h.b16 %v2462
    %v2556 = vunpack.c.l.b16 %v2463
    %v2557 = vunpack.c.h.b16 %v2463
    %v2558 = vunpack.c.l.b16 %v2464
    %v2559 = vunpack.c.h.b16 %v2464
    %v2560 = vunpack.c.l.b16 %v2465
    %v2561 = vunpack.c.h.b16 %v2465
    %v2562 = vunpack.c.l.b16 %v2466
    %v2563 = vunpack.c.h.b16 %v2466
    %v2564 = vunpack.c.l.b16 %v2467
    %v2565 = vunpack.c.h.b16 %v2467
    %v2566 = vunpack.c.l.b16 %v2468
    %v2567 = vunpack.c.h.b16 %v2468
    %v2568 = vunpack.c.l.b16 %v2469
    %v2569 = vunpack.c.h.b16 %v2469
    %v2570 = vunpack.c.l.b16 %v2470
    %v2571 = vunpack.c.h.b16 %v2470
    %v2572 = vunpack.c.l.b16 %v2471
    %v2573 = vunpack.c.h.b16 %v2471
    %v2574 = vpack.c.b16 %v2512, %v2510
    %v2575 = vpack.c.b16 %v2513, %v2511
    %v2576 = vpack.c.b16 %v2516, %v2514
    %v2577 = vpack.c.b16 %v2517, %v2515
    %v2578 = vpack.c.b16 %v2520, %v2518
    %v2579 = vpack.c.b16 %v2521, %v2519
    %v2580 = vpack.c.b16 %v2524, %v2522
    %v2581 = vpack.c.b16 %v2525, %v2523
    %v2582 = vpack.c.b16 %v2528, %v2526
    %v2583 = vpack.c.b16 %v2529, %v2527
    %v2584 = vpack.c.b16 %v2532, %v2530
    %v2585 = vpack.c.b16 %v2533, %v2531
    %v2586 = vpack.c.b16 %v2536, %v2534
    %v2587 = vpack.c.b16 %v2537, %v2535
    %v2588 = vpack.c.b16 %v2540, %v2538
    %v2589 = vpack.c.b16 %v2541, %v2539
    %v2590 = vpack.c.b16 %v2544, %v2542
    %v2591 = vpack.c.b16 %v2545, %v2543
    %v2592 = vpack.c.b16 %v2548, %v2546
    %v2593 = vpack.c.b16 %v2549, %v2547
    %v2594 = vpack.c.b16 %v2552, %v2550
    %v2595 = vpack.c.b16 %v2553, %v2551
    %v2596 = vpack.c.b16 %v2556, %v2554
    %v2597 = vpack.c.b16 %v2557, %v2555
    %v2598 = vpack.c.b16 %v2560, %v2558
    %v2599 = vpack.c.b16 %v2561, %v2559
    %v2600 = vpack.c.b16 %v2564, %v2562
    %v2601 = vpack.c.b16 %v2565, %v2563
    %v2602 = vpack.c.b16 %v2568, %v2566
    %v2603 = vpack.c.b16 %v2569, %v2567
    %v2604 = vpack.c.b16 %v2572, %v2570
    %v2605 = vpack.c.b16 %v2573, %v2571
    %2638 = vmatpush.bf16.msra.mxu0 %v2588
    %2639 = vmatpush.bf16.msra.mxu0 %v2586
    %2640 = vmatpush.bf16.msra.mxu0 %v2584
    %2641 = vmatpush.bf16.msra.mxu0 %v2582
    %2642 = vmatpush.bf16.msra.mxu0 %v2580
    %2643 = vmatpush.bf16.msra.mxu0 %v2578
    %2644 = vmatpush.bf16.msra.mxu0 %v2576
    %2645 = vmatpush.bf16.msra.mxu0 %v2574
    %2646 = vmatmul.bf16.gmra.mxu0 %v2438
    %v2647 = vpop.f32.mrf.mxu0
    %v2648 = vadd.f32 %v2474, %v2647
    %v2649 = vpop.f32.mrf.mxu0
    %2650 = vdwg.mxu0
    %2651 = vmatpush.bf16.msra.mxu0 %v2604
    %2652 = vmatpush.bf16.msra.mxu0 %v2602
    %2653 = vmatpush.bf16.msra.mxu0 %v2600
    %2654 = vmatpush.bf16.msra.mxu0 %v2598
    %2655 = vmatpush.bf16.msra.mxu0 %v2596
    %2656 = vmatpush.bf16.msra.mxu0 %v2594
    %2657 = vmatpush.bf16.msra.mxu0 %v2592
    %2658 = vmatpush.bf16.msra.mxu0 %v2590
    %2659 = vmatmul.bf16.gmra.mxu0 %v2439
    %v2660 = vpop.f32.mrf.mxu0
    %v2661 = vadd.f32 %v2648, %v2660
    %v2662 = vpop.f32.mrf.mxu0
    %2663 = vdwg.mxu0
    %2664 = vmatpush.bf16.msra.mxu0 %v2589
    %2665 = vmatpush.bf16.msra.mxu0 %v2587
    %2666 = vmatpush.bf16.msra.mxu0 %v2585
    %2667 = vmatpush.bf16.msra.mxu0 %v2583
    %2668 = vmatpush.bf16.msra.mxu0 %v2581
    %2669 = vmatpush.bf16.msra.mxu0 %v2579
    %2670 = vmatpush.bf16.msra.mxu0 %v2577
    %2671 = vmatpush.bf16.msra.mxu0 %v2575
    %2672 = vmatmul.bf16.gmra.mxu0 %v2438
    %v2673 = vpop.f32.mrf.mxu0
    %v2674 = vadd.f32 %v2475, %v2673
    %v2675 = vpop.f32.mrf.mxu0
    %2676 = vdwg.mxu0
    %2677 = vmatpush.bf16.msra.mxu0 %v2605
    %2678 = vmatpush.bf16.msra.mxu0 %v2603
    %2679 = vmatpush.bf16.msra.mxu0 %v2601
    %2680 = vmatpush.bf16.msra.mxu0 %v2599
    %2681 = vmatpush.bf16.msra.mxu0 %v2597
    %2682 = vmatpush.bf16.msra.mxu0 %v2595
    %2683 = vmatpush.bf16.msra.mxu0 %v2593
    %2684 = vmatpush.bf16.msra.mxu0 %v2591
    %2685 = vmatmul.bf16.gmra.mxu0 %v2439
    %v2686 = vpop.f32.mrf.mxu0
    %v2687 = vadd.f32 %v2674, %v2686
    %v2688 = vpop.f32.mrf.mxu0
    %2689 = vdwg.mxu0
    %v2690 = vmax.f32 %v2661, 0.0
    %v2691 = vmax.f32 %v2687, 0.0
    %v2692 = vpack.c.bf16 %v2690, %v2690
    %v2693 = vpack.c.bf16 %v2691, %v2691
    %v2694 = vld [vmem:[#allocation8] sm:$0xf]
    %v2695 = vld [vmem:[#allocation8 + $0x4] sm:$0xf]
    %v2696 = vld [vmem:[#allocation8 + $0x8] sm:$0xf]
    %v2697 = vld [vmem:[#allocation8 + $0xc] sm:$0xf]
    %v2698 = vld [vmem:[#allocation8 + $0x10] sm:$0xf]
    %v2699 = vld [vmem:[#allocation8 + $0x14] sm:$0xf]
    %v2700 = vld [vmem:[#allocation8 + $0x18] sm:$0xf]
    %v2701 = vld [vmem:[#allocation8 + $0x1c] sm:$0xf]
    %v2702 = vld [vmem:[#allocation8 + $0x20] sm:$0xf]
    %v2703 = vld [vmem:[#allocation8 + $0x24] sm:$0xf]
    %v2704 = vld [vmem:[#allocation8 + $0x28] sm:$0xf]
    %v2705 = vld [vmem:[#allocation8 + $0x2c] sm:$0xf]
    %v2706 = vld [vmem:[#allocation8 + $0x30] sm:$0xf]
    %v2707 = vld [vmem:[#allocation8 + $0x34] sm:$0xf]
    %v2708 = vld [vmem:[#allocation8 + $0x38] sm:$0xf]
    %v2709 = vld [vmem:[#allocation8 + $0x3c] sm:$0xf]
    %v2710 = vld [vmem:[#allocation8 + $0x40] sm:$0xf]
    %v2711 = vld [vmem:[#allocation8 + $0x44] sm:$0xf]
    %v2712 = vld [vmem:[#allocation8 + $0x48] sm:$0xf]
    %v2713 = vld [vmem:[#allocation8 + $0x4c] sm:$0xf]
    %v2714 = vld [vmem:[#allocation8 + $0x50] sm:$0xf]
    %v2715 = vld [vmem:[#allocation8 + $0x54] sm:$0xf]
    %v2716 = vld [vmem:[#allocation8 + $0x58] sm:$0xf]
    %v2717 = vld [vmem:[#allocation8 + $0x5c] sm:$0xf]
    %v2718 = vld [vmem:[#allocation8 + $0x60] sm:$0xf]
    %v2719 = vld [vmem:[#allocation8 + $0x64] sm:$0xf]
    %v2720 = vld [vmem:[#allocation8 + $0x68] sm:$0xf]
    %v2721 = vld [vmem:[#allocation8 + $0x6c] sm:$0xf]
    %v2722 = vld [vmem:[#allocation8 + $0x70] sm:$0xf]
    %v2723 = vld [vmem:[#allocation8 + $0x74] sm:$0xf]
    %v2724 = vld [vmem:[#allocation8 + $0x78] sm:$0xf]
    %v2725 = vld [vmem:[#allocation8 + $0x7c] sm:$0xf]
    %v2726 = vld [vmem:[%s10] sm:$0x1]
    %v2728 = vperm.slane %v2726, 0
    %v2762 = vunpack.c.l.b16 %v2694
    %v2763 = vunpack.c.l.b16 %v2695
    %v2764 = vunpack.c.l.b16 %v2696
    %v2765 = vunpack.c.l.b16 %v2697
    %v2766 = vunpack.c.l.b16 %v2698
    %v2767 = vunpack.c.l.b16 %v2699
    %v2768 = vunpack.c.l.b16 %v2700
    %v2769 = vunpack.c.l.b16 %v2701
    %v2770 = vunpack.c.l.b16 %v2702
    %v2771 = vunpack.c.l.b16 %v2703
    %v2772 = vunpack.c.l.b16 %v2704
    %v2773 = vunpack.c.l.b16 %v2705
    %v2774 = vunpack.c.l.b16 %v2706
    %v2775 = vunpack.c.l.b16 %v2707
    %v2776 = vunpack.c.l.b16 %v2708
    %v2777 = vunpack.c.l.b16 %v2709
    %v2778 = vunpack.c.l.b16 %v2710
    %v2779 = vunpack.c.l.b16 %v2711
    %v2780 = vunpack.c.l.b16 %v2712
    %v2781 = vunpack.c.l.b16 %v2713
    %v2782 = vunpack.c.l.b16 %v2714
    %v2783 = vunpack.c.l.b16 %v2715
    %v2784 = vunpack.c.l.b16 %v2716
    %v2785 = vunpack.c.l.b16 %v2717
    %v2786 = vunpack.c.l.b16 %v2718
    %v2787 = vunpack.c.l.b16 %v2719
    %v2788 = vunpack.c.l.b16 %v2720
    %v2789 = vunpack.c.l.b16 %v2721
    %v2790 = vunpack.c.l.b16 %v2722
    %v2791 = vunpack.c.l.b16 %v2723
    %v2792 = vunpack.c.l.b16 %v2724
    %v2793 = vunpack.c.l.b16 %v2725
    %v2794 = vpack.c.b16 %v2763, %v2762
    %v2795 = vpack.c.b16 %v2765, %v2764
    %v2796 = vpack.c.b16 %v2767, %v2766
    %v2797 = vpack.c.b16 %v2769, %v2768
    %v2798 = vpack.c.b16 %v2771, %v2770
    %v2799 = vpack.c.b16 %v2773, %v2772
    %v2800 = vpack.c.b16 %v2775, %v2774
    %v2801 = vpack.c.b16 %v2777, %v2776
    %v2802 = vpack.c.b16 %v2779, %v2778
    %v2803 = vpack.c.b16 %v2781, %v2780
    %v2804 = vpack.c.b16 %v2783, %v2782
    %v2805 = vpack.c.b16 %v2785, %v2784
    %v2806 = vpack.c.b16 %v2787, %v2786
    %v2807 = vpack.c.b16 %v2789, %v2788
    %v2808 = vpack.c.b16 %v2791, %v2790
    %v2809 = vpack.c.b16 %v2793, %v2792
    %2826 = vmatpush.bf16.msra.mxu0 %v2801
    %2827 = vmatpush.bf16.msra.mxu0 %v2800
    %2828 = vmatpush.bf16.msra.mxu0 %v2799
    %2829 = vmatpush.bf16.msra.mxu0 %v2798
    %2830 = vmatpush.bf16.msra.mxu0 %v2797
    %2831 = vmatpush.bf16.msra.mxu0 %v2796
    %2832 = vmatpush.bf16.msra.mxu0 %v2795
    %2833 = vmatpush.bf16.msra.mxu0 %v2794
    %2834 = vmatmul.bf16.gmra.mxu0 %v2692
    %v2835 = vpop.f32.mrf.mxu0
    %v2836 = vadd.f32 %v2728, %v2835
    %v2837 = vpop.f32.mrf.mxu0
    %2838 = vdwg.mxu0
    %2839 = vmatpush.bf16.msra.mxu0 %v2809
    %2840 = vmatpush.bf16.msra.mxu0 %v2808
    %2841 = vmatpush.bf16.msra.mxu0 %v2807
    %2842 = vmatpush.bf16.msra.mxu0 %v2806
    %2843 = vmatpush.bf16.msra.mxu0 %v2805
    %2844 = vmatpush.bf16.msra.mxu0 %v2804
    %2845 = vmatpush.bf16.msra.mxu0 %v2803
    %2846 = vmatpush.bf16.msra.mxu0 %v2802
    %2847 = vmatmul.bf16.gmra.mxu0 %v2693
    %v2848 = vpop.f32.mrf.mxu0
    %v2849 = vadd.f32 %v2836, %v2848
    %v2850 = vpop.f32.mrf.mxu0
    %2851 = vdwg.mxu0
    %v2852 = vmax.f32 %v2849, 0.0
    %v2853 = vpack.c.bf16 %v2852, %v2852
    %v2854 = vld [vmem:[%s11] sm:$0xf]
    %v2855 = vld [vmem:[%s11 + $0x4] sm:$0xf]
    %v2856 = vld [vmem:[%s11 + $0x8] sm:$0xf]
    %v2857 = vld [vmem:[%s11 + $0xc] sm:$0xf]
    %v2858 = vld [vmem:[%s11 + $0x10] sm:$0xf]
    %v2859 = vld [vmem:[%s11 + $0x14] sm:$0xf]
    %v2860 = vld [vmem:[%s11 + $0x18] sm:$0xf]
    %v2861 = vld [vmem:[%s11 + $0x1c] sm:$0xf]
    %v2862 = vld [vmem:[%s11 + $0x20] sm:$0xf]
    %v2863 = vld [vmem:[%s11 + $0x24] sm:$0xf]
    %v2864 = vld [vmem:[%s11 + $0x28] sm:$0xf]
    %v2865 = vld [vmem:[%s11 + $0x2c] sm:$0xf]
    %v2866 = vld [vmem:[%s11 + $0x30] sm:$0xf]
    %v2867 = vld [vmem:[%s11 + $0x34] sm:$0xf]
    %v2868 = vld [vmem:[%s11 + $0x38] sm:$0xf]
    %v2869 = vld [vmem:[%s11 + $0x3c] sm:$0xf]
    %v2870 = vld [vmem:[%s12] sm:$0x1]
    %v2872 = vperm.slane %v2870, 0
    %v2890 = vunpack.c.l.b16 %v2854
    %v2891 = vunpack.c.l.b16 %v2855
    %v2892 = vunpack.c.l.b16 %v2856
    %v2893 = vunpack.c.l.b16 %v2857
    %v2894 = vunpack.c.l.b16 %v2858
    %v2895 = vunpack.c.l.b16 %v2859
    %v2896 = vunpack.c.l.b16 %v2860
    %v2897 = vunpack.c.l.b16 %v2861
    %v2898 = vunpack.c.l.b16 %v2862
    %v2899 = vunpack.c.l.b16 %v2863
    %v2900 = vunpack.c.l.b16 %v2864
    %v2901 = vunpack.c.l.b16 %v2865
    %v2902 = vunpack.c.l.b16 %v2866
    %v2903 = vunpack.c.l.b16 %v2867
    %v2904 = vunpack.c.l.b16 %v2868
    %v2905 = vunpack.c.l.b16 %v2869
    %v2906 = vpack.c.b16 %v2891, %v2890
    %v2907 = vpack.c.b16 %v2893, %v2892
    %v2908 = vpack.c.b16 %v2895, %v2894
    %v2909 = vpack.c.b16 %v2897, %v2896
    %v2910 = vpack.c.b16 %v2899, %v2898
    %v2911 = vpack.c.b16 %v2901, %v2900
    %v2912 = vpack.c.b16 %v2903, %v2902
    %v2913 = vpack.c.b16 %v2905, %v2904
    %2922 = vmatpush.bf16.msra.mxu0 %v2913
    %2923 = vmatpush.bf16.msra.mxu0 %v2912
    %2924 = vmatpush.bf16.msra.mxu0 %v2911
    %2925 = vmatpush.bf16.msra.mxu0 %v2910
    %2926 = vmatpush.bf16.msra.mxu0 %v2909
    %2927 = vmatpush.bf16.msra.mxu0 %v2908
    %2928 = vmatpush.bf16.msra.mxu0 %v2907
    %2929 = vmatpush.bf16.msra.mxu0 %v2906
    %2930 = vmatmul.bf16.gmra.mxu0 %v2853
    %v2931 = vpop.f32.mrf.mxu0
    %v2932 = vadd.f32 %v2872, %v2931
    %v2933 = vpop.f32.mrf.mxu0
    %2934 = vdwg.mxu0
    %2935 = vst [vmem:[%s13] sm:$0xff] %v2932
    // Predicated region
    $region70: #{cnn_model_bn_forward.1} parent=1 // pred_check
      _
    $region71: #{cnn_model_bn_forward.1} parent=1 // pred_check_branch
      %2937 = sbr.rel (0) target = $region73
    $region72: #{cnn_model_bn_forward.1} parent=1 // pred_region
      _
    $region73: #{cnn_model_bn_forward.1} parent=1 // pred_fallthru
      _
    // Predicated region
    $region74: #{cnn_model_bn_forward.1} parent=1 // pred_check
      _
    $region75: #{cnn_model_bn_forward.1} parent=1 // pred_check_branch
      %2939 = sbr.rel (0) target = $region77
    $region76: #{cnn_model_bn_forward.1} parent=1 // pred_region
      _
    $region77: #{cnn_model_bn_forward.1} parent=1 // pred_fallthru
      _
    %2940 = vsyncpa [#allocation4], 1
    %2941 = vsyncpa [#allocation6], 1
    %2942 = vsyncpa [#allocation9], 1

</llo_original>
